<compile_context>
chip_gen: v7x
topology: tpu7x:2x2x1
jax: 0.10.0
libtpu: 0.0.40
codegen_flags: <defaults>
</compile_context>

<pallas_src>
import functools

import jax
import jax.numpy as jnp
from jax.experimental import pallas as pl
from jax.experimental.pallas import tpu as pltpu


def _round_up(x, m):
    return ((x + m - 1) // m) * m


def _default_vmem_limit():
    """~3/4 of per-core VMEM, capped at 96 MiB (48 MiB on v7x, 96 MiB on v5e/v6e)."""
    try:
        cap = pltpu.get_tpu_info().vmem_capacity_bytes
    except Exception:
        cap = 64 * 1024 * 1024          # v7x worst case -> 48 MiB limit, safe everywhere
    return int(min(cap * 3 // 4, 96 * 1024 * 1024))


def _clam_sb_kernel(h_ref, w1_ref, b1_ref, wf_ref, bf_ref, wc_ref, bc_ref,
                    atten_ref, logits_t_ref,
                    *, d_attn, d_seg, n_classes, tile_n, compute_dtype):
    """One tile of TILE_N patches -> lane-dense per-row attention scores + instance logits."""
    # h arrives in its storage dtype (usually f32) and is cast per-tile: no wrapper
    # pad+astype pre-pass over the whole slide (saves ~3x redundant HBM traffic).
    h = h_ref[...].astype(compute_dtype)                                   # [T, L]

    # fc + ReLU  (bf16 operands, f32 accumulation on the MXU)
    h1_f32 = jnp.maximum(
        jnp.dot(h, w1_ref[...], preferred_element_type=jnp.float32) + b1_ref[...], 0.0)
    h1 = h1_f32.astype(compute_dtype)                                      # [T, H]

    # Single fused MXU pass for [wa | wb | wcls] (segments 128-lane aligned in the
    # wrapper) -> replaces three matmuls; the C=2 classifier one was nearly empty.
    fused = jnp.dot(h1, wf_ref[...], preferred_element_type=jnp.float32) + bf_ref[...]  # [T, F]

    a = jnp.tanh(fused[:, :d_attn])                                        # [T, D] f32 (EUP)
    b = jax.nn.sigmoid(fused[:, d_seg:d_seg + d_attn])                     # [T, D] f32 (EUP)
    logits = fused[:, 2 * d_seg:2 * d_seg + n_classes]                     # [T, C] f32

    gated = a * b                                                          # [T, D] f32 (VPU)
    # attention_c: Linear(D, 1) as a row-broadcast multiply + lane reduction (XLU),
    # kept in f32 and off the MXU (a width-1 MXU output would waste a whole pass).
    A = jnp.sum(gated * wc_ref[...], axis=1, keepdims=True) + bc_ref[...]  # [T, 1]
    sig = jax.nn.sigmoid(A)                                                # [T, 1]

    # Lane-dense per-row outputs (transposed so the last dim = TILE_N -> unmasked vst).
    atten_ref[...] = jnp.concatenate([A.T, sig.T], axis=0).reshape(1, 2, tile_n)
    logits_t_ref[...] = logits.T.reshape(1, n_classes, tile_n)


def clam_sb_forward(h, params, *, tile_n=None, compute_dtype=jnp.bfloat16,
                    vmem_limit_bytes=None):
    N, L = h.shape
    H = params["w1"].shape[1]
    D = params["wa"].shape[1]
    C = params["wcls"].shape[1]

    # --- tile sizing: big tiles amortize per-step overhead; clamp to the problem size.
    #     (Users may push to 2048 on v5e/v6e; 1024 also fits v7x's 64 MiB VMEM.) ---
    if tile_n is None:
        tile_n = 1024
    tile_n = max(128, min(_round_up(tile_n, 128), _round_up(N, 128)))
    num_tiles = pl.cdiv(N, tile_n)
    n_pad = num_tiles * tile_n

    if vmem_limit_bytes is None:
        vmem_limit_bytes = _default_vmem_limit()

    # --- weights: bf16 operands for the MXU, f32 biases; [wa | wb | wcls] fused with
    #     128-lane-aligned segments so in-kernel slices are cheap. ---
    Dp = _round_up(D, 128)
    Cp = _round_up(C, 128)
    F = 2 * Dp + Cp
    w1 = params["w1"].astype(compute_dtype)
    b1 = params["b1"].astype(jnp.float32)
    wf = jnp.zeros((H, F), compute_dtype)
    wf = wf.at[:, :D].set(params["wa"].astype(compute_dtype))
    wf = wf.at[:, Dp:Dp + D].set(params["wb"].astype(compute_dtype))
    wf = wf.at[:, 2 * Dp:2 * Dp + C].set(params["wcls"].astype(compute_dtype))
    bf = jnp.zeros((1, F), jnp.float32)
    bf = bf.at[:, :D].set(params["ba"].astype(jnp.float32))
    bf = bf.at[:, Dp:Dp + D].set(params["bb"].astype(jnp.float32))
    bf = bf.at[:, 2 * Dp:2 * Dp + C].set(params["bcls"].astype(jnp.float32))
    wc = params["wc"].astype(jnp.float32)           # [1, D]
    bc = params["bc"].astype(jnp.float32)           # [1, 1]

    kernel = functools.partial(_clam_sb_kernel, d_attn=D, d_seg=Dp, n_classes=C,
                               tile_n=tile_n, compute_dtype=compute_dtype)

    itemsize = jnp.dtype(compute_dtype).itemsize
    cost = pl.CostEstimate(
        flops=2 * n_pad * H * (L + F),
        transcendentals=n_pad * (2 * D + 2),
        bytes_accessed=(N * L * jnp.dtype(h.dtype).itemsize
                        + (L * H + H * F) * itemsize
                        + n_pad * (2 + C) * 4),
    )

    def run(single_buffer_weights):
        const = lambda i: (0, 0)
        if single_buffer_weights:
            # Constant-index residents never refill their 2nd pipeline buffer -> reclaim it.
            resident = lambda s: pl.BlockSpec(s, const, pipeline_mode=pl.Buffered(1))
        else:
            resident = lambda s: pl.BlockSpec(s, const)
        grid_spec = pltpu.PrefetchScalarGridSpec(
            num_scalar_prefetch=0,
            grid=(num_tiles,),
            in_specs=[
                pl.BlockSpec((tile_n, L), lambda i: (i, 0)),   # h tile: double-buffered HBM stream
                resident((L, H)),                              # w1
                resident((1, H)),                              # b1
                resident((H, F)),                              # fused [wa | wb | wcls]
                resident((1, F)),                              # fused biases
                resident((1, D)),                              # attention_c weight row
                resident((1, 1)),                              # attention_c bias
            ],
            out_specs=[
                pl.BlockSpec((1, 2, tile_n), lambda i: (i, 0, 0)),   # [raw A ; sigmoid], lane-dense
                pl.BlockSpec((1, C, tile_n), lambda i: (i, 0, 0)),   # instance logits^T, lane-dense
            ],
        )
        return pl.pallas_call(
            kernel,
            grid_spec=grid_spec,
            out_shape=(
                jax.ShapeDtypeStruct((num_tiles, 2, tile_n), jnp.float32),
                jax.ShapeDtypeStruct((num_tiles, C, tile_n), jnp.float32),
            ),
            compiler_params=pltpu.CompilerParams(
                dimension_semantics=("parallel",),      # tiles independent -> megacore sharding (v7x)
                vmem_limit_bytes=int(vmem_limit_bytes),
            ),
            cost_estimate=cost,
        )(h, w1, b1, wf, bf, wc, bc)

    try:
        atten_pack, logits_t = run(True)
    except Exception:
        # Fallback for JAX builds without BlockSpec pipeline_mode / pl.Buffered support.
        atten_pack, logits_t = run(False)

    # --- trailing XLA: slice off the ragged-tail rows, then the tiny global reduction ---
    atten_raw = atten_pack[:, 0, :].reshape(1, n_pad)[:, :N]               # [1, N]
    atten_sigmoid = atten_pack[:, 1, :].reshape(1, n_pad)[:, :N]           # [1, N]
    instance_logits = logits_t.transpose(0, 2, 1).reshape(n_pad, C)[:N]    # [N, C]

    den = jnp.sum(atten_sigmoid)                                           # Σ sigmoid(A)
    atten_softmax = atten_sigmoid / den
    slide_logits = jnp.sum(atten_sigmoid.T * instance_logits,
                           axis=0, keepdims=True) / den                    # == atten_softmax^T @ logits
    slide_prob = jax.nn.softmax(slide_logits, axis=1)
    slide_pred = jnp.argmax(slide_logits, axis=1).reshape(1, 1).astype(jnp.int32)
    y_prob_instance = jax.nn.softmax(instance_logits, axis=1)
    results_dict = {}
    # TODO(synk): instance_eval / neg-pos patch-loss branches (top-k gather + CE/MSE losses)
    # are optional training-time paths and are left to host-side JAX.
    return (slide_logits, slide_prob, slide_pred, atten_raw,
            atten_softmax, atten_sigmoid, y_prob_instance, results_dict)


def init_params(key, L, H, D, C):
    """Deterministic xavier-normal weights, zero biases (mirrors initialize_weights)."""
    def xavier(k, shape):
        fan_in, fan_out = shape
        std = (2.0 / (fan_in + fan_out)) ** 0.5
        return std * jax.random.normal(k, shape, dtype=jnp.float32)

    ks = jax.random.split(key, 5)
    return {
        "w1":   xavier(ks[0], (L, H)), "b1":   jnp.zeros((1, H), jnp.float32),
        "wa":   xavier(ks[1], (H, D)), "ba":   jnp.zeros((1, D), jnp.float32),
        "wb":   xavier(ks[2], (H, D)), "bb":   jnp.zeros((1, D), jnp.float32),
        # attention_c: Linear(D, 1) stored as a [1, D] row vector
        "wc":   xavier(ks[3], (D, 1)).T, "bc": jnp.zeros((1, 1), jnp.float32),
        "wcls": xavier(ks[4], (H, C)), "bcls": jnp.zeros((1, C), jnp.float32),
    }


def reference_forward(h, p, compute_dtype=jnp.bfloat16):
    """Pure-JAX reference using the same bf16-operand / f32-accumulate recipe."""
    hc = h.astype(compute_dtype)
    w1, wa, wb, wcls = (p[k].astype(compute_dtype) for k in ("w1", "wa", "wb", "wcls"))
    h1f = jnp.maximum(jnp.dot(hc, w1, preferred_element_type=jnp.float32) + p["b1"], 0.0)
    h1 = h1f.astype(compute_dtype)
    a = jnp.tanh(jnp.dot(h1, wa, preferred_element_type=jnp.float32) + p["ba"])
    b = jax.nn.sigmoid(jnp.dot(h1, wb, preferred_element_type=jnp.float32) + p["bb"])
    A = jnp.sum((a * b) * p["wc"], axis=1, keepdims=True) + p["bc"]
    sig = jax.nn.sigmoid(A)
    w = sig / jnp.sum(sig)
    logits = jnp.dot(h1, wcls, preferred_element_type=jnp.float32) + p["bcls"]
    slide = w.T @ logits
    return (slide, jax.nn.softmax(slide, axis=1), A.T, w.T, sig.T,
            jax.nn.softmax(logits, axis=1))


if __name__ == "__main__":
    import numpy as np
    # Small, structure-consistent shapes. N deliberately NOT a multiple of the tile
    # to exercise the partial-last-block path. (Real CLAM: N~10k-100k, L=1024/2048,
    # H=512, D=256 -> use the default tile_n there.)
    N, L, H, D, C = 300, 64, 32, 16, 2
    key = jax.random.PRNGKey(0)
    k_h, k_p = jax.random.split(key)
    h = jax.random.normal(k_h, (N, L), dtype=jnp.float32)
    params = init_params(k_p, L, H, D, C)

    ref_slide, ref_prob, ref_A, ref_w, ref_sig, ref_yinst = reference_forward(h, params)
    tol = dict(rtol=2e-2, atol=2e-2)

    # tile_n=128: multi-tile grid with a ragged last tile; tile_n=None: auto (single tile).
    for tn in (128, None):
        outs = jax.block_until_ready(clam_sb_forward(h, params, tile_n=tn))
        (slide_logits, slide_prob, slide_pred, atten_raw,
         atten_softmax, atten_sigmoid, y_prob_instance, results_dict) = outs

        np.testing.assert_allclose(np.asarray(slide_logits),    np.asarray(ref_slide), **tol)
        np.testing.assert_allclose(np.asarray(slide_prob),      np.asarray(ref_prob),  **tol)
        np.testing.assert_allclose(np.asarray(atten_raw),       np.asarray(ref_A),     **tol)
        np.testing.assert_allclose(np.asarray(atten_softmax),   np.asarray(ref_w),     **tol)
        np.testing.assert_allclose(np.asarray(atten_sigmoid),   np.asarray(ref_sig),   **tol)
        np.testing.assert_allclose(np.asarray(y_prob_instance), np.asarray(ref_yinst), **tol)
        assert slide_logits.shape == (1, C) and slide_pred.shape == (1, 1)
        assert atten_raw.shape == (1, N) and atten_softmax.shape == (1, N)
        assert y_prob_instance.shape == (N, C)

    print("KERNEL_OK")
</pallas_src>

<mosaic_0001>
module attributes {stable_mosaic.version = 11 : i64} {
  func.func @_clam_sb_kernel(%arg0: i32, %arg1: memref<128x64xf32, #tpu.memory_space<vmem>>, %arg2: memref<64x32xbf16, #tpu.memory_space<vmem>>, %arg3: memref<1x32xf32, #tpu.memory_space<vmem>>, %arg4: memref<32x384xbf16, #tpu.memory_space<vmem>>, %arg5: memref<1x384xf32, #tpu.memory_space<vmem>>, %arg6: memref<1x16xf32, #tpu.memory_space<vmem>>, %arg7: memref<1x1xf32, #tpu.memory_space<vmem>>, %arg8: memref<1x2x128xf32, #tpu.memory_space<vmem>>, %arg9: memref<1x2x128xf32, #tpu.memory_space<vmem>>) attributes {dimension_semantics = [#tpu.dimension_semantics<parallel>], iteration_bounds = array<i64: 3>, scalar_prefetch = 0 : i64, scratch_operands = 0 : i64, tpu.core_type = #tpu.core_type<tc>, window_params = [{transform_indices = @transform_0, window_bounds = array<i64: 128, 64>}, {pipeline_mode = #tpu.pipeline_mode<synchronous>, transform_indices = @transform_1, window_bounds = array<i64: 64, 32>}, {pipeline_mode = #tpu.pipeline_mode<synchronous>, transform_indices = @transform_2, window_bounds = array<i64: 1, 32>}, {pipeline_mode = #tpu.pipeline_mode<synchronous>, transform_indices = @transform_3, window_bounds = array<i64: 32, 384>}, {pipeline_mode = #tpu.pipeline_mode<synchronous>, transform_indices = @transform_4, window_bounds = array<i64: 1, 384>}, {pipeline_mode = #tpu.pipeline_mode<synchronous>, transform_indices = @transform_5, window_bounds = array<i64: 1, 16>}, {pipeline_mode = #tpu.pipeline_mode<synchronous>, transform_indices = @transform_6, window_bounds = array<i64: 1, 1>}, {transform_indices = @transform_7, window_bounds = array<i64: 1, 2, 128>}, {transform_indices = @transform_8, window_bounds = array<i64: 1, 2, 128>}]} {
    %c0 = arith.constant 0 : index
    %c0_0 = arith.constant 0 : index
    %0 = vector.load %arg1[%c0, %c0_0] : memref<128x64xf32, #tpu.memory_space<vmem>>, vector<128x64xf32>
    %1 = arith.truncf %0 : vector<128x64xf32> to vector<128x64xbf16>
    %c0_1 = arith.constant 0 : index
    %c0_2 = arith.constant 0 : index
    %2 = vector.load %arg2[%c0_1, %c0_2] : memref<64x32xbf16, #tpu.memory_space<vmem>>, vector<64x32xbf16>
    %cst = arith.constant dense<0.000000e+00> : vector<128x32xf32>
    %3 = tpu.matmul %1, %2, %cst {dimension_numbers = #tpu.dot_dimension_numbers<[1], [0], [0], [1], [0, 0, 1, 1], [], []>} : vector<128x64xbf16>, vector<64x32xbf16>, vector<128x32xf32> -> vector<128x32xf32>
    %c0_3 = arith.constant 0 : index
    %c0_4 = arith.constant 0 : index
    %4 = vector.load %arg3[%c0_3, %c0_4] : memref<1x32xf32, #tpu.memory_space<vmem>>, vector<1x32xf32>
    %5 = vector.broadcast %4 : vector<1x32xf32> to vector<128x32xf32>
    %6 = arith.addf %3, %5 : vector<128x32xf32>
    %cst_5 = arith.constant 0.000000e+00 : f32
    %7 = vector.broadcast %cst_5 : f32 to vector<128x32xf32>
    %8 = arith.maximumf %6, %7 : vector<128x32xf32>
    %9 = arith.truncf %8 : vector<128x32xf32> to vector<128x32xbf16>
    %c0_6 = arith.constant 0 : index
    %c0_7 = arith.constant 0 : index
    %10 = vector.load %arg4[%c0_6, %c0_7] : memref<32x384xbf16, #tpu.memory_space<vmem>>, vector<32x384xbf16>
    %cst_8 = arith.constant dense<0.000000e+00> : vector<128x384xf32>
    %11 = tpu.matmul %9, %10, %cst_8 {dimension_numbers = #tpu.dot_dimension_numbers<[1], [0], [0], [1], [0, 0, 1, 1], [], []>} : vector<128x32xbf16>, vector<32x384xbf16>, vector<128x384xf32> -> vector<128x384xf32>
    %c0_9 = arith.constant 0 : index
    %c0_10 = arith.constant 0 : index
    %12 = vector.load %arg5[%c0_9, %c0_10] : memref<1x384xf32, #tpu.memory_space<vmem>>, vector<1x384xf32>
    %13 = vector.broadcast %12 : vector<1x384xf32> to vector<128x384xf32>
    %14 = arith.addf %11, %13 : vector<128x384xf32>
    %15 = vector.extract_strided_slice %14 {offsets = [0, 0], sizes = [128, 16], strides = [1, 1]} : vector<128x384xf32> to vector<128x16xf32>
    %16 = math.tanh %15 : vector<128x16xf32>
    %17 = vector.extract_strided_slice %14 {offsets = [0, 128], sizes = [128, 16], strides = [1, 1]} : vector<128x384xf32> to vector<128x16xf32>
    %18 = arith.negf %17 : vector<128x16xf32>
    %19 = math.exp %18 : vector<128x16xf32>
    %cst_11 = arith.constant 1.000000e+00 : f32
    %20 = vector.broadcast %cst_11 : f32 to vector<128x16xf32>
    %21 = arith.addf %20, %19 : vector<128x16xf32>
    %22 = arith.divf %20, %21 : vector<128x16xf32>
    %23 = vector.extract_strided_slice %14 {offsets = [0, 256], sizes = [128, 2], strides = [1, 1]} : vector<128x384xf32> to vector<128x2xf32>
    %24 = arith.mulf %16, %22 : vector<128x16xf32>
    %c0_12 = arith.constant 0 : index
    %c0_13 = arith.constant 0 : index
    %25 = vector.load %arg6[%c0_12, %c0_13] : memref<1x16xf32, #tpu.memory_space<vmem>>, vector<1x16xf32>
    %26 = vector.broadcast %25 : vector<1x16xf32> to vector<128x16xf32>
    %27 = arith.mulf %24, %26 : vector<128x16xf32>
    %cst_14 = arith.constant dense<0.000000e+00> : vector<128xf32>
    %28 = vector.multi_reduction <add>, %27, %cst_14 [1] : vector<128x16xf32> to vector<128xf32>
    %29 = vector.shape_cast %28 : vector<128xf32> to vector<128x1xf32>
    %c0_15 = arith.constant 0 : index
    %c0_16 = arith.constant 0 : index
    %30 = vector.load %arg7[%c0_15, %c0_16] : memref<1x1xf32, #tpu.memory_space<vmem>>, vector<1x1xf32>
    %31 = vector.broadcast %30 : vector<1x1xf32> to vector<128x1xf32>
    %32 = arith.addf %29, %31 : vector<128x1xf32>
    %33 = arith.negf %32 : vector<128x1xf32>
    %34 = math.exp %33 : vector<128x1xf32>
    %cst_17 = arith.constant 1.000000e+00 : f32
    %35 = vector.broadcast %cst_17 : f32 to vector<128x1xf32>
    %36 = arith.addf %35, %34 : vector<128x1xf32>
    %37 = arith.divf %35, %36 : vector<128x1xf32>
    %38 = tpu.transpose %32, [1, 0] : vector<128x1xf32> -> vector<1x128xf32>
    %39 = tpu.transpose %37, [1, 0] : vector<128x1xf32> -> vector<1x128xf32>
    %40 = tpu.concatenate %38, %39 in 0 : vector<1x128xf32>, vector<1x128xf32> -> vector<2x128xf32>
    %41 = vector.shape_cast %40 : vector<2x128xf32> to vector<1x2x128xf32>
    %c0_18 = arith.constant 0 : index
    %c0_19 = arith.constant 0 : index
    %c0_20 = arith.constant 0 : index
    %42 = vector.load %arg8[%c0_18, %c0_19, %c0_20] : memref<1x2x128xf32, #tpu.memory_space<vmem>>, vector<1x2x128xf32>
    tpu.vector_store %arg8[%c0_18, %c0_19, %c0_20], %41 {strides = array<i32>} : memref<1x2x128xf32, #tpu.memory_space<vmem>>, vector<1x2x128xf32>,
    %43 = tpu.transpose %23, [1, 0] : vector<128x2xf32> -> vector<2x128xf32>
    %44 = vector.shape_cast %43 : vector<2x128xf32> to vector<1x2x128xf32>
    %c0_21 = arith.constant 0 : index
    %c0_22 = arith.constant 0 : index
    %c0_23 = arith.constant 0 : index
    %45 = vector.load %arg9[%c0_21, %c0_22, %c0_23] : memref<1x2x128xf32, #tpu.memory_space<vmem>>, vector<1x2x128xf32>
    tpu.vector_store %arg9[%c0_21, %c0_22, %c0_23], %44 {strides = array<i32>} : memref<1x2x128xf32, #tpu.memory_space<vmem>>, vector<1x2x128xf32>,
    return
  }
  func.func @transform_0(%arg0: i32) -> (i32, i32) {
    %c0_i32 = arith.constant 0 : i32
    %c0_i32_0 = arith.constant 0 : i32
    return %arg0, %c0_i32 : i32, i32
  }
  func.func @transform_1(%arg0: i32) -> (i32, i32) {
    %c0_i32 = arith.constant 0 : i32
    %c0_i32_0 = arith.constant 0 : i32
    %c0_i32_1 = arith.constant 0 : i32
    return %c0_i32, %c0_i32_0 : i32, i32
  }
  func.func @transform_2(%arg0: i32) -> (i32, i32) {
    %c0_i32 = arith.constant 0 : i32
    %c0_i32_0 = arith.constant 0 : i32
    %c0_i32_1 = arith.constant 0 : i32
    return %c0_i32, %c0_i32_0 : i32, i32
  }
  func.func @transform_3(%arg0: i32) -> (i32, i32) {
    %c0_i32 = arith.constant 0 : i32
    %c0_i32_0 = arith.constant 0 : i32
    %c0_i32_1 = arith.constant 0 : i32
    return %c0_i32, %c0_i32_0 : i32, i32
  }
  func.func @transform_4(%arg0: i32) -> (i32, i32) {
    %c0_i32 = arith.constant 0 : i32
    %c0_i32_0 = arith.constant 0 : i32
    %c0_i32_1 = arith.constant 0 : i32
    return %c0_i32, %c0_i32_0 : i32, i32
  }
  func.func @transform_5(%arg0: i32) -> (i32, i32) {
    %c0_i32 = arith.constant 0 : i32
    %c0_i32_0 = arith.constant 0 : i32
    %c0_i32_1 = arith.constant 0 : i32
    return %c0_i32, %c0_i32_0 : i32, i32
  }
  func.func @transform_6(%arg0: i32) -> (i32, i32) {
    %c0_i32 = arith.constant 0 : i32
    %c0_i32_0 = arith.constant 0 : i32
    %c0_i32_1 = arith.constant 0 : i32
    return %c0_i32, %c0_i32_0 : i32, i32
  }
  func.func @transform_7(%arg0: i32) -> (i32, i32, i32) {
    %c0_i32 = arith.constant 0 : i32
    %c0_i32_0 = arith.constant 0 : i32
    %c0_i32_1 = arith.constant 0 : i32
    return %arg0, %c0_i32, %c0_i32_0 : i32, i32, i32
  }
  func.func @transform_8(%arg0: i32) -> (i32, i32, i32) {
    %c0_i32 = arith.constant 0 : i32
    %c0_i32_0 = arith.constant 0 : i32
    %c0_i32_1 = arith.constant 0 : i32
    return %arg0, %c0_i32, %c0_i32_0 : i32, i32, i32
  }
}

module attributes {stable_mosaic.version = 11 : i64} {
  func.func @_clam_sb_kernel(%arg0: i32, %arg1: memref<128x64xf32, #tpu.memory_space<vmem>>, %arg2: memref<64x32xbf16, #tpu.memory_space<vmem>>, %arg3: memref<1x32xf32, #tpu.memory_space<vmem>>, %arg4: memref<32x384xbf16, #tpu.memory_space<vmem>>, %arg5: memref<1x384xf32, #tpu.memory_space<vmem>>, %arg6: memref<1x16xf32, #tpu.memory_space<vmem>>, %arg7: memref<1x1xf32, #tpu.memory_space<vmem>>, %arg8: memref<1x2x128xf32, #tpu.memory_space<vmem>>, %arg9: memref<1x2x128xf32, #tpu.memory_space<vmem>>) attributes {dimension_semantics = [#tpu.dimension_semantics<parallel>], iteration_bounds = array<i64: 3>, scalar_prefetch = 0 : i64, scratch_operands = 0 : i64, tpu.core_type = #tpu.core_type<tc>, window_params = [{transform_indices = @transform_0, window_bounds = array<i64: 128, 64>}, {pipeline_mode = #tpu.pipeline_mode<synchronous>, transform_indices = @transform_1, window_bounds = array<i64: 64, 32>}, {pipeline_mode = #tpu.pipeline_mode<synchronous>, transform_indices = @transform_2, window_bounds = array<i64: 1, 32>}, {pipeline_mode = #tpu.pipeline_mode<synchronous>, transform_indices = @transform_3, window_bounds = array<i64: 32, 384>}, {pipeline_mode = #tpu.pipeline_mode<synchronous>, transform_indices = @transform_4, window_bounds = array<i64: 1, 384>}, {pipeline_mode = #tpu.pipeline_mode<synchronous>, transform_indices = @transform_5, window_bounds = array<i64: 1, 16>}, {pipeline_mode = #tpu.pipeline_mode<synchronous>, transform_indices = @transform_6, window_bounds = array<i64: 1, 1>}, {transform_indices = @transform_7, window_bounds = array<i64: 1, 2, 128>}, {transform_indices = @transform_8, window_bounds = array<i64: 1, 2, 128>}]} {
    %c0 = arith.constant 0 : index
    %c0_0 = arith.constant 0 : index
    %0 = vector.load %arg1[%c0, %c0_0] : memref<128x64xf32, #tpu.memory_space<vmem>>, vector<128x64xf32>
    %1 = arith.truncf %0 : vector<128x64xf32> to vector<128x64xbf16>
    %c0_1 = arith.constant 0 : index
    %c0_2 = arith.constant 0 : index
    %2 = vector.load %arg2[%c0_1, %c0_2] : memref<64x32xbf16, #tpu.memory_space<vmem>>, vector<64x32xbf16>
    %cst = arith.constant dense<0.000000e+00> : vector<128x32xf32>
    %3 = tpu.matmul %1, %2, %cst {dimension_numbers = #tpu.dot_dimension_numbers<[1], [0], [0], [1], [0, 0, 1, 1], [], []>} : vector<128x64xbf16>, vector<64x32xbf16>, vector<128x32xf32> -> vector<128x32xf32>
    %c0_3 = arith.constant 0 : index
    %c0_4 = arith.constant 0 : index
    %4 = vector.load %arg3[%c0_3, %c0_4] : memref<1x32xf32, #tpu.memory_space<vmem>>, vector<1x32xf32>
    %5 = vector.broadcast %4 : vector<1x32xf32> to vector<128x32xf32>
    %6 = arith.addf %3, %5 : vector<128x32xf32>
    %cst_5 = arith.constant 0.000000e+00 : f32
    %7 = vector.broadcast %cst_5 : f32 to vector<128x32xf32>
    %8 = arith.maximumf %6, %7 : vector<128x32xf32>
    %9 = arith.truncf %8 : vector<128x32xf32> to vector<128x32xbf16>
    %c0_6 = arith.constant 0 : index
    %c0_7 = arith.constant 0 : index
    %10 = vector.load %arg4[%c0_6, %c0_7] : memref<32x384xbf16, #tpu.memory_space<vmem>>, vector<32x384xbf16>
    %cst_8 = arith.constant dense<0.000000e+00> : vector<128x384xf32>
    %11 = tpu.matmul %9, %10, %cst_8 {dimension_numbers = #tpu.dot_dimension_numbers<[1], [0], [0], [1], [0, 0, 1, 1], [], []>} : vector<128x32xbf16>, vector<32x384xbf16>, vector<128x384xf32> -> vector<128x384xf32>
    %c0_9 = arith.constant 0 : index
    %c0_10 = arith.constant 0 : index
    %12 = vector.load %arg5[%c0_9, %c0_10] : memref<1x384xf32, #tpu.memory_space<vmem>>, vector<1x384xf32>
    %13 = vector.broadcast %12 : vector<1x384xf32> to vector<128x384xf32>
    %14 = arith.addf %11, %13 : vector<128x384xf32>
    %15 = vector.extract_strided_slice %14 {offsets = [0, 0], sizes = [128, 16], strides = [1, 1]} : vector<128x384xf32> to vector<128x16xf32>
    %16 = math.tanh %15 : vector<128x16xf32>
    %17 = vector.extract_strided_slice %14 {offsets = [0, 128], sizes = [128, 16], strides = [1, 1]} : vector<128x384xf32> to vector<128x16xf32>
    %18 = arith.negf %17 : vector<128x16xf32>
    %19 = math.exp %18 : vector<128x16xf32>
    %cst_11 = arith.constant 1.000000e+00 : f32
    %20 = vector.broadcast %cst_11 : f32 to vector<128x16xf32>
    %21 = arith.addf %20, %19 : vector<128x16xf32>
    %22 = arith.divf %20, %21 : vector<128x16xf32>
    %23 = vector.extract_strided_slice %14 {offsets = [0, 256], sizes = [128, 2], strides = [1, 1]} : vector<128x384xf32> to vector<128x2xf32>
    %24 = arith.mulf %16, %22 : vector<128x16xf32>
    %c0_12 = arith.constant 0 : index
    %c0_13 = arith.constant 0 : index
    %25 = vector.load %arg6[%c0_12, %c0_13] : memref<1x16xf32, #tpu.memory_space<vmem>>, vector<1x16xf32>
    %26 = vector.broadcast %25 : vector<1x16xf32> to vector<128x16xf32>
    %27 = arith.mulf %24, %26 : vector<128x16xf32>
    %cst_14 = arith.constant dense<0.000000e+00> : vector<128xf32>
    %28 = vector.multi_reduction <add>, %27, %cst_14 [1] : vector<128x16xf32> to vector<128xf32>
    %29 = vector.shape_cast %28 : vector<128xf32> to vector<128x1xf32>
    %c0_15 = arith.constant 0 : index
    %c0_16 = arith.constant 0 : index
    %30 = vector.load %arg7[%c0_15, %c0_16] : memref<1x1xf32, #tpu.memory_space<vmem>>, vector<1x1xf32>
    %31 = vector.broadcast %30 : vector<1x1xf32> to vector<128x1xf32>
    %32 = arith.addf %29, %31 : vector<128x1xf32>
    %33 = arith.negf %32 : vector<128x1xf32>
    %34 = math.exp %33 : vector<128x1xf32>
    %cst_17 = arith.constant 1.000000e+00 : f32
    %35 = vector.broadcast %cst_17 : f32 to vector<128x1xf32>
    %36 = arith.addf %35, %34 : vector<128x1xf32>
    %37 = arith.divf %35, %36 : vector<128x1xf32>
    %38 = tpu.transpose %32, [1, 0] : vector<128x1xf32> -> vector<1x128xf32>
    %39 = tpu.transpose %37, [1, 0] : vector<128x1xf32> -> vector<1x128xf32>
    %40 = tpu.concatenate %38, %39 in 0 : vector<1x128xf32>, vector<1x128xf32> -> vector<2x128xf32>
    %41 = vector.shape_cast %40 : vector<2x128xf32> to vector<1x2x128xf32>
    %c0_18 = arith.constant 0 : index
    %c0_19 = arith.constant 0 : index
    %c0_20 = arith.constant 0 : index
    %42 = vector.load %arg8[%c0_18, %c0_19, %c0_20] : memref<1x2x128xf32, #tpu.memory_space<vmem>>, vector<1x2x128xf32>
    tpu.vector_store %arg8[%c0_18, %c0_19, %c0_20], %41 {strides = array<i32>} : memref<1x2x128xf32, #tpu.memory_space<vmem>>, vector<1x2x128xf32>,
    %43 = tpu.transpose %23, [1, 0] : vector<128x2xf32> -> vector<2x128xf32>
    %44 = vector.shape_cast %43 : vector<2x128xf32> to vector<1x2x128xf32>
    %c0_21 = arith.constant 0 : index
    %c0_22 = arith.constant 0 : index
    %c0_23 = arith.constant 0 : index
    %45 = vector.load %arg9[%c0_21, %c0_22, %c0_23] : memref<1x2x128xf32, #tpu.memory_space<vmem>>, vector<1x2x128xf32>
    tpu.vector_store %arg9[%c0_21, %c0_22, %c0_23], %44 {strides = array<i32>} : memref<1x2x128xf32, #tpu.memory_space<vmem>>, vector<1x2x128xf32>,
    return
  }
  func.func @transform_0(%arg0: i32) -> (i32, i32) {
    %c0_i32 = arith.constant 0 : i32
    %c0_i32_0 = arith.constant 0 : i32
    return %arg0, %c0_i32 : i32, i32
  }
  func.func @transform_1(%arg0: i32) -> (i32, i32) {
    %c0_i32 = arith.constant 0 : i32
    %c0_i32_0 = arith.constant 0 : i32
    %c0_i32_1 = arith.constant 0 : i32
    return %c0_i32, %c0_i32_0 : i32, i32
  }
  func.func @transform_2(%arg0: i32) -> (i32, i32) {
    %c0_i32 = arith.constant 0 : i32
    %c0_i32_0 = arith.constant 0 : i32
    %c0_i32_1 = arith.constant 0 : i32
    return %c0_i32, %c0_i32_0 : i32, i32
  }
  func.func @transform_3(%arg0: i32) -> (i32, i32) {
    %c0_i32 = arith.constant 0 : i32
    %c0_i32_0 = arith.constant 0 : i32
    %c0_i32_1 = arith.constant 0 : i32
    return %c0_i32, %c0_i32_0 : i32, i32
  }
  func.func @transform_4(%arg0: i32) -> (i32, i32) {
    %c0_i32 = arith.constant 0 : i32
    %c0_i32_0 = arith.constant 0 : i32
    %c0_i32_1 = arith.constant 0 : i32
    return %c0_i32, %c0_i32_0 : i32, i32
  }
  func.func @transform_5(%arg0: i32) -> (i32, i32) {
    %c0_i32 = arith.constant 0 : i32
    %c0_i32_0 = arith.constant 0 : i32
    %c0_i32_1 = arith.constant 0 : i32
    return %c0_i32, %c0_i32_0 : i32, i32
  }
  func.func @transform_6(%arg0: i32) -> (i32, i32) {
    %c0_i32 = arith.constant 0 : i32
    %c0_i32_0 = arith.constant 0 : i32
    %c0_i32_1 = arith.constant 0 : i32
    return %c0_i32, %c0_i32_0 : i32, i32
  }
  func.func @transform_7(%arg0: i32) -> (i32, i32, i32) {
    %c0_i32 = arith.constant 0 : i32
    %c0_i32_0 = arith.constant 0 : i32
    %c0_i32_1 = arith.constant 0 : i32
    return %arg0, %c0_i32, %c0_i32_0 : i32, i32, i32
  }
  func.func @transform_8(%arg0: i32) -> (i32, i32, i32) {
    %c0_i32 = arith.constant 0 : i32
    %c0_i32_0 = arith.constant 0 : i32
    %c0_i32_1 = arith.constant 0 : i32
    return %arg0, %c0_i32, %c0_i32_0 : i32, i32, i32
  }
}

</mosaic_0001>

<llo_original>
// kernel: tpu_custom_call.1
$region0: #{tpu_custom_call.1}
  #allocation0 [shape = 'u32[]', space=smem, size = 0x4, offset = 0x4, fixed_abs, tag = 'smem constant byte address 0x4 - core index']
  #allocation1 [shape = 'u32[144,128]{1,0:T(1,128)}', space=vmem, size = 0x12000, scoped, tag = 'internal scratch']
  #allocation2 [shape = 'f32[1,1]{1,0:T(1,128)S(1)}', space=vmem, size = 0x200, scoped, tag = 'scoped memory for tpu_custom_call.1']
  %s0 = inlined_call_operand.vmem [shape: f32[300,64], index: 0, kind: input, shape index: {}]
  %s1 = inlined_call_operand.vmem [shape: bf16[64,32], index: 1, kind: input, shape index: {}]
  %s2 = inlined_call_operand.vmem [shape: f32[1,32], index: 2, kind: input, shape index: {}]
  %s3 = inlined_call_operand.vmem [shape: bf16[32,384], index: 3, kind: input, shape index: {}]
  %s4 = inlined_call_operand.vmem [shape: f32[1,384], index: 4, kind: input, shape index: {}]
  %s5 = inlined_call_operand.vmem [shape: f32[1,16], index: 5, kind: input, shape index: {}]
  %s6 = inlined_call_operand.<no memory space> [shape: f32[1,1], index: 6, kind: input, shape index: {}]
  %s7 = inlined_call_operand.hbm [shape: f32[3,2,128], index: 7, kind: output, shape index: {0}]
  %s8 = inlined_call_operand.hbm [shape: f32[3,2,128], index: 8, kind: output, shape index: {1}]
  %9 = xla_tuple %s7, %s8
  %s10 = sld [smem:[#allocation0]]
  $region69: #{tpu_custom_call.1} parent=0
    _
  %s12 = ssub.s32 1, %s10
  %s13 = scalar_select 0, %s12, %s10
  %v14 = vstv %s6
  %15 = vst [vmem:[#allocation2] sm:$0x1] %v14
  $region1: #{tpu_custom_call.1} parent=0
    #allocation3 [shape = 'u8[2048]{0}', space=vmem, size = 0x800, scoped, tag = 'output window, operand 0']
    #allocation4 [shape = 's32[2]{0}', space=sflag, size = 0x8, scoped, tag = 'scoped memory for tpu_custom_call.1']
    #allocation5 [shape = 'u8[2048]{0}', space=vmem, size = 0x800, scoped, tag = 'output window, operand 1']
    #allocation6 [shape = 's32[2]{0}', space=sflag, size = 0x8, scoped, tag = 'scoped memory for tpu_custom_call.1']
    %16 = vsyncpa [#allocation4], 0
    %s17 = scalar_lea.sflag [#allocation4], 1
    %18 = vsyncpa %s17, 0
    %19 = vsyncpa [#allocation6], 0
    %s20 = scalar_lea.sflag [#allocation6], 1
    %21 = vsyncpa %s20, 0
    loop: start=0, step=1, limit=5
    $region2: #{tpu_custom_call.1} parent=1 // loop_pre_header
      _
    $region3: #{tpu_custom_call.1} parent=1 // loop_header
      %s23 = sphi 0, %s27
      %p24 = scmp.ge.s32.totalorder %s23, 5
      %s33 = sphi 0, %s35
      %s36 = sphi 0, %s33
      %s37 = sphi 0, %s36
      %s53 = sphi 0, %s37
      %s57 = sphi 0, %s57
      %s59 = sphi 0, %s57
      %s60 = sphi 0, %s59
      %s74 = sphi 0, %s60
      %s78 = sphi 0, %s78
      %s80 = sphi 0, %s78
      %s81 = sphi 0, %s80
      %s95 = sphi 0, %s81
      %s99 = sphi 0, %s99
      %s101 = sphi 0, %s99
      %s102 = sphi 0, %s101
      %s116 = sphi 0, %s102
      %s120 = sphi 0, %s120
      %s122 = sphi 0, %s120
      %s123 = sphi 0, %s122
      %s137 = sphi 0, %s123
      %s141 = sphi 0, %s141
      %s143 = sphi 0, %s141
      %s144 = sphi 0, %s143
      %s158 = sphi 0, %s144
      %s162 = sphi 0, %s162
      %s164 = sphi 0, %s162
      %s165 = sphi 0, %s164
      %s179 = sphi 0, %s165
      %s185 = sphi 0, %s187
      %s188 = sphi 0, %s185
      %s189 = sphi 0, %s188
      %s205 = sphi 0, %s189
      %s211 = sphi 0, %s213
      %s214 = sphi 0, %s211
      %s215 = sphi 0, %s214
      %s231 = sphi 0, %s215
    $region4: #{tpu_custom_call.1} parent=1 // loop_header_branch
      %26 = sbr.rel (%p24) target = $region8
    $region5: #{tpu_custom_call.1} parent=1 // loop_body
      %s28 = ssub.s32 %s23, 1
      %s29 = ssub.s32 %s23, 2
      %s30 = sadd.s32 %s23, 1
      %s31 = ssub.s32 %s23, %s30
      %p32 = scmp.eq.s32.totalorder %s31, 0
      %s34 = sadd.s32 %s33, 1
      %s35 = scalar_select %p32, %s33, %s34
      %p38 = pneg %p32
      %p39 = scmp.eq.s32.totalorder %s23, 2
      %p40 = por %p38, %p39
      %p41 = scmp.ne.s32.totalorder %s33, %s36
      %p42 = scmp.eq.s32.totalorder %s23, 0
      %p43 = por %p41, %p42
      %p44 = scmp.ne.s32.totalorder %s33, %s36
      %p45 = scmp.eq.s32.totalorder %s28, 2
      %p46 = por %p44, %p45
      %p47 = scmp.ne.s32.totalorder %s36, %s37
      %p48 = scmp.eq.s32.totalorder %s28, 0
      %p49 = por %p47, %p48
      %p50 = scmp.ne.s32.totalorder %s36, %s37
      %p51 = scmp.eq.s32.totalorder %s29, 2
      %p52 = por %p50, %p51
      %p54 = scmp.ne.s32.totalorder %s37, %s53
      %p55 = scmp.eq.s32.totalorder %s29, 0
      %p56 = por %p54, %p55
      %s58 = sadd.s32 %s57, 1
      %p61 = scmp.eq.s32.totalorder %s23, 2
      %p62 = scmp.ne.s32.totalorder %s57, %s59
      %p63 = scmp.eq.s32.totalorder %s23, 0
      %p64 = por %p62, %p63
      %p65 = scmp.ne.s32.totalorder %s57, %s59
      %p66 = scmp.eq.s32.totalorder %s28, 2
      %p67 = por %p65, %p66
      %p68 = scmp.ne.s32.totalorder %s59, %s60
      %p69 = scmp.eq.s32.totalorder %s28, 0
      %p70 = por %p68, %p69
      %p71 = scmp.ne.s32.totalorder %s59, %s60
      %p72 = scmp.eq.s32.totalorder %s29, 2
      %p73 = por %p71, %p72
      %p75 = scmp.ne.s32.totalorder %s60, %s74
      %p76 = scmp.eq.s32.totalorder %s29, 0
      %p77 = por %p75, %p76
      %s79 = sadd.s32 %s78, 1
      %p82 = scmp.eq.s32.totalorder %s23, 2
      %p83 = scmp.ne.s32.totalorder %s78, %s80
      %p84 = scmp.eq.s32.totalorder %s23, 0
      %p85 = por %p83, %p84
      %p86 = scmp.ne.s32.totalorder %s78, %s80
      %p87 = scmp.eq.s32.totalorder %s28, 2
      %p88 = por %p86, %p87
      %p89 = scmp.ne.s32.totalorder %s80, %s81
      %p90 = scmp.eq.s32.totalorder %s28, 0
      %p91 = por %p89, %p90
      %p92 = scmp.ne.s32.totalorder %s80, %s81
      %p93 = scmp.eq.s32.totalorder %s29, 2
      %p94 = por %p92, %p93
      %p96 = scmp.ne.s32.totalorder %s81, %s95
      %p97 = scmp.eq.s32.totalorder %s29, 0
      %p98 = por %p96, %p97
      %s100 = sadd.s32 %s99, 1
      %p103 = scmp.eq.s32.totalorder %s23, 2
      %p104 = scmp.ne.s32.totalorder %s99, %s101
      %p105 = scmp.eq.s32.totalorder %s23, 0
      %p106 = por %p104, %p105
      %p107 = scmp.ne.s32.totalorder %s99, %s101
      %p108 = scmp.eq.s32.totalorder %s28, 2
      %p109 = por %p107, %p108
      %p110 = scmp.ne.s32.totalorder %s101, %s102
      %p111 = scmp.eq.s32.totalorder %s28, 0
      %p112 = por %p110, %p111
      %p113 = scmp.ne.s32.totalorder %s101, %s102
      %p114 = scmp.eq.s32.totalorder %s29, 2
      %p115 = por %p113, %p114
      %p117 = scmp.ne.s32.totalorder %s102, %s116
      %p118 = scmp.eq.s32.totalorder %s29, 0
      %p119 = por %p117, %p118
      %s121 = sadd.s32 %s120, 1
      %p124 = scmp.eq.s32.totalorder %s23, 2
      %p125 = scmp.ne.s32.totalorder %s120, %s122
      %p126 = scmp.eq.s32.totalorder %s23, 0
      %p127 = por %p125, %p126
      %p128 = scmp.ne.s32.totalorder %s120, %s122
      %p129 = scmp.eq.s32.totalorder %s28, 2
      %p130 = por %p128, %p129
      %p131 = scmp.ne.s32.totalorder %s122, %s123
      %p132 = scmp.eq.s32.totalorder %s28, 0
      %p133 = por %p131, %p132
      %p134 = scmp.ne.s32.totalorder %s122, %s123
      %p135 = scmp.eq.s32.totalorder %s29, 2
      %p136 = por %p134, %p135
      %p138 = scmp.ne.s32.totalorder %s123, %s137
      %p139 = scmp.eq.s32.totalorder %s29, 0
      %p140 = por %p138, %p139
      %s142 = sadd.s32 %s141, 1
      %p145 = scmp.eq.s32.totalorder %s23, 2
      %p146 = scmp.ne.s32.totalorder %s141, %s143
      %p147 = scmp.eq.s32.totalorder %s23, 0
      %p148 = por %p146, %p147
      %p149 = scmp.ne.s32.totalorder %s141, %s143
      %p150 = scmp.eq.s32.totalorder %s28, 2
      %p151 = por %p149, %p150
      %p152 = scmp.ne.s32.totalorder %s143, %s144
      %p153 = scmp.eq.s32.totalorder %s28, 0
      %p154 = por %p152, %p153
      %p155 = scmp.ne.s32.totalorder %s143, %s144
      %p156 = scmp.eq.s32.totalorder %s29, 2
      %p157 = por %p155, %p156
      %p159 = scmp.ne.s32.totalorder %s144, %s158
      %p160 = scmp.eq.s32.totalorder %s29, 0
      %p161 = por %p159, %p160
      %s163 = sadd.s32 %s162, 1
      %p166 = scmp.eq.s32.totalorder %s23, 2
      %p167 = scmp.ne.s32.totalorder %s162, %s164
      %p168 = scmp.eq.s32.totalorder %s23, 0
      %p169 = por %p167, %p168
      %p170 = scmp.ne.s32.totalorder %s162, %s164
      %p171 = scmp.eq.s32.totalorder %s28, 2
      %p172 = por %p170, %p171
      %p173 = scmp.ne.s32.totalorder %s164, %s165
      %p174 = scmp.eq.s32.totalorder %s28, 0
      %p175 = por %p173, %p174
      %p176 = scmp.ne.s32.totalorder %s164, %s165
      %p177 = scmp.eq.s32.totalorder %s29, 2
      %p178 = por %p176, %p177
      %p180 = scmp.ne.s32.totalorder %s165, %s179
      %p181 = scmp.eq.s32.totalorder %s29, 0
      %p182 = por %p180, %p181
      %s183 = ssub.s32 %s23, %s30
      %p184 = scmp.eq.s32.totalorder %s183, 0
      %s186 = sadd.s32 %s185, 1
      %s187 = scalar_select %p184, %s185, %s186
      %p190 = pneg %p184
      %p191 = scmp.eq.s32.totalorder %s23, 2
      %p192 = por %p190, %p191
      %p193 = scmp.ne.s32.totalorder %s185, %s188
      %p194 = scmp.eq.s32.totalorder %s23, 0
      %p195 = por %p193, %p194
      %p196 = scmp.ne.s32.totalorder %s185, %s188
      %p197 = scmp.eq.s32.totalorder %s28, 2
      %p198 = por %p196, %p197
      %p199 = scmp.ne.s32.totalorder %s188, %s189
      %p200 = scmp.eq.s32.totalorder %s28, 0
      %p201 = por %p199, %p200
      %p202 = scmp.ne.s32.totalorder %s188, %s189
      %p203 = scmp.eq.s32.totalorder %s29, 2
      %p204 = por %p202, %p203
      %p206 = scmp.ne.s32.totalorder %s189, %s205
      %p207 = scmp.eq.s32.totalorder %s29, 0
      %p208 = por %p206, %p207
      %s209 = ssub.s32 %s23, %s30
      %p210 = scmp.eq.s32.totalorder %s209, 0
      %s212 = sadd.s32 %s211, 1
      %s213 = scalar_select %p210, %s211, %s212
      %p216 = pneg %p210
      %p217 = scmp.eq.s32.totalorder %s23, 2
      %p218 = por %p216, %p217
      %p219 = scmp.ne.s32.totalorder %s211, %s214
      %p220 = scmp.eq.s32.totalorder %s23, 0
      %p221 = por %p219, %p220
      %p222 = scmp.ne.s32.totalorder %s211, %s214
      %p223 = scmp.eq.s32.totalorder %s28, 2
      %p224 = por %p222, %p223
      %p225 = scmp.ne.s32.totalorder %s214, %s215
      %p226 = scmp.eq.s32.totalorder %s28, 0
      %p227 = por %p225, %p226
      %p228 = scmp.ne.s32.totalorder %s214, %s215
      %p229 = scmp.eq.s32.totalorder %s29, 2
      %p230 = por %p228, %p229
      %p232 = scmp.ne.s32.totalorder %s215, %s231
      %p233 = scmp.eq.s32.totalorder %s29, 0
      %p234 = por %p232, %p233
      %p235 = scmp.le.s32.totalorder 1, %s23
      %p236 = scmp.lt.s32.totalorder %s23, 4
      %p237 = pnand %p235, %p236
      %p238 = pneg %p237
      // Predicated region
      $region9: #{tpu_custom_call.1} parent=5 // pred_check
        _
      $region10: #{tpu_custom_call.1} parent=5 // pred_check_branch
        %240 = sbr.rel (%p237) target = $region12
      $region11: #{tpu_custom_call.1} parent=5 // pred_region
        %s241 = ssub.s32 %s23, 1
        // Predicated region
        $region13: #{tpu_custom_call.1} parent=11 // pred_check
          %p242 = pneg %p70
        $region14: #{tpu_custom_call.1} parent=11 // pred_check_branch
          %244 = sbr.rel (%p242) target = $region16
        $region15: #{tpu_custom_call.1} parent=11 // pred_region
          _
        $region16: #{tpu_custom_call.1} parent=11 // pred_fallthru
          _
        // Predicated region
        $region17: #{tpu_custom_call.1} parent=11 // pred_check
          %p245 = pneg %p91
        $region18: #{tpu_custom_call.1} parent=11 // pred_check_branch
          %247 = sbr.rel (%p245) target = $region20
        $region19: #{tpu_custom_call.1} parent=11 // pred_region
          _
        $region20: #{tpu_custom_call.1} parent=11 // pred_fallthru
          _
        // Predicated region
        $region21: #{tpu_custom_call.1} parent=11 // pred_check
          %p248 = pneg %p112
        $region22: #{tpu_custom_call.1} parent=11 // pred_check_branch
          %250 = sbr.rel (%p248) target = $region24
        $region23: #{tpu_custom_call.1} parent=11 // pred_region
          _
        $region24: #{tpu_custom_call.1} parent=11 // pred_fallthru
          _
        // Predicated region
        $region25: #{tpu_custom_call.1} parent=11 // pred_check
          %p251 = pneg %p133
        $region26: #{tpu_custom_call.1} parent=11 // pred_check_branch
          %253 = sbr.rel (%p251) target = $region28
        $region27: #{tpu_custom_call.1} parent=11 // pred_region
          _
        $region28: #{tpu_custom_call.1} parent=11 // pred_fallthru
          _
        // Predicated region
        $region29: #{tpu_custom_call.1} parent=11 // pred_check
          %p254 = pneg %p154
        $region30: #{tpu_custom_call.1} parent=11 // pred_check_branch
          %256 = sbr.rel (%p254) target = $region32
        $region31: #{tpu_custom_call.1} parent=11 // pred_region
          _
        $region32: #{tpu_custom_call.1} parent=11 // pred_fallthru
          _
        // Predicated region
        $region33: #{tpu_custom_call.1} parent=11 // pred_check
          %p257 = pneg %p175
        $region34: #{tpu_custom_call.1} parent=11 // pred_check_branch
          %259 = sbr.rel (%p257) target = $region36
        $region35: #{tpu_custom_call.1} parent=11 // pred_region
          _
        $region36: #{tpu_custom_call.1} parent=11 // pred_fallthru
          _
      $region12: #{tpu_custom_call.1} parent=5 // pred_fallthru
        _
      %p260 = scmp.lt.s32.totalorder %s23, 3
      // Predicated region
      $region37: #{tpu_custom_call.1} parent=5 // pred_check
        %p261 = pneg %p260
      $region38: #{tpu_custom_call.1} parent=5 // pred_check_branch
        %263 = sbr.rel (%p261) target = $region40
      $region39: #{tpu_custom_call.1} parent=5 // pred_region
        // Predicated region
        $region41: #{tpu_custom_call.1} parent=39 // pred_check
          %p264 = pneg %p43
        $region42: #{tpu_custom_call.1} parent=39 // pred_check_branch
          %266 = sbr.rel (%p264) target = $region44
        $region43: #{tpu_custom_call.1} parent=39 // pred_region
          %s267 = smul.u32 16, %s23
          %s268 = ssub.s32 38, %s267
          %p269 = scmp.lt.s32.totalorder %s268, 16
          %s270 = scalar_select %p269, %s268, 16
          %s271 = smul.u32 128, %s270
          %p272 = scmp.lt.s32.totalorder %s267, 37
          %s273 = scalar_select %p272, %s267, 37
          %s274 = smul.addr %s273, 8
          %s275 = scalar_lea.vmem %s0, %s274
          %s276 = smul.u32 16, %s23
          %s277 = ssub.s32 38, %s276
          %p278 = scmp.lt.s32.totalorder %s277, 16
          %s279 = scalar_select %p278, %s277, 16
          %s280 = smul.u32 128, %s279
        $region44: #{tpu_custom_call.1} parent=39 // pred_fallthru
          _
      $region40: #{tpu_custom_call.1} parent=5 // pred_fallthru
        _
      %p281 = scmp.le.s32.totalorder 1, %s23
      %p282 = scmp.lt.s32.totalorder %s23, 4
      %p283 = pnand %p281, %p282
      %p284 = pneg %p283
      // Predicated region
      $region45: #{tpu_custom_call.1} parent=5 // pred_check
        _
      $region46: #{tpu_custom_call.1} parent=5 // pred_check_branch
        %286 = sbr.rel (%p283) target = $region48
      $region47: #{tpu_custom_call.1} parent=5 // pred_region
        %s287 = ssub.s32 %s23, 1
        %s288 = smul.u32 16, %s28
        %s289 = ssub.s32 38, %s288
        %p290 = scmp.lt.s32.totalorder %s289, 16
        %s291 = scalar_select %p290, %s289, 16
        %s292 = smul.u32 128, %s291
        %p293 = scmp.lt.s32.totalorder %s288, 37
        %s294 = scalar_select %p293, %s288, 37
        %s295 = smul.addr %s294, 8
        %s296 = scalar_lea.vmem %s0, %s295
        %p297 = pneg %p49
        %p298 = pneg %p46
        %p299 = pneg %p70
        %p300 = pneg %p67
        %p301 = pneg %p91
        %p302 = pneg %p88
        %p303 = pneg %p112
        %p304 = pneg %p109
        %p305 = pneg %p133
        %p306 = pneg %p130
        %p307 = pneg %p154
        %p308 = pneg %p151
        %p309 = pneg %p175
        %p310 = pneg %p172
        %p311 = pneg %p201
        %p312 = pneg %p198
        %s313 = sand.u32 %s188, 1
        %s314 = scalar_lea.sflag [#allocation4], %s313
        %s315 = sand.u32 %s188, 1
        %s316 = smul.addr %s315, 2
        %s317 = scalar_lea.vmem [#allocation3], %s316
        %p318 = pneg %p227
        %p319 = pneg %p224
        %s320 = sand.u32 %s214, 1
        %s321 = scalar_lea.sflag [#allocation6], %s320
        %s322 = sand.u32 %s214, 1
        %s323 = smul.addr %s322, 2
        %s324 = scalar_lea.vmem [#allocation5], %s323
        %s325 = smul.u32 16, %s28
        %s326 = ssub.s32 38, %s325
        %p327 = scmp.lt.s32.totalorder %s326, 16
        %s328 = scalar_select %p327, %s326, 16
        %s329 = smul.u32 128, %s328
        %p330 = scmp.lt.s32.totalorder %s325, 37
        %s331 = scalar_select %p330, %s325, 37
        %s332 = smul.addr %s331, 8
        %s333 = scalar_lea.vmem %s0, %s332
        %s334 = smul.u32 16, %s28
        %s335 = ssub.s32 38, %s334
        %p336 = scmp.lt.s32.totalorder %s335, 16
        %s337 = scalar_select %p336, %s335, 16
        %s338 = smul.u32 128, %s337
        %v340 = vld [vmem:[%s333] sm:$0xff]
        %v341 = vld [vmem:[%s333 + $0x8] sm:$0xff]
        %v342 = vld [vmem:[%s333 + $0x10] sm:$0xff]
        %v343 = vld [vmem:[%s333 + $0x18] sm:$0xff]
        %v344 = vld [vmem:[%s333 + $0x20] sm:$0xff]
        %v345 = vld [vmem:[%s333 + $0x28] sm:$0xff]
        %v346 = vld [vmem:[%s333 + $0x30] sm:$0xff]
        %v347 = vld [vmem:[%s333 + $0x38] sm:$0xff]
        %v348 = vld [vmem:[%s333 + $0x40] sm:$0xff]
        %v349 = vld [vmem:[%s333 + $0x48] sm:$0xff]
        %v350 = vld [vmem:[%s333 + $0x50] sm:$0xff]
        %v351 = vld [vmem:[%s333 + $0x58] sm:$0xff]
        %v352 = vld [vmem:[%s333 + $0x60] sm:$0xff]
        %v353 = vld [vmem:[%s333 + $0x68] sm:$0xff]
        %v354 = vld [vmem:[%s333 + $0x70] sm:$0xff]
        %v355 = vld [vmem:[%s333 + $0x78] sm:$0xff]
        %v356 = vpack.c.bf16 %v341, %v340
        %v357 = vpack.c.bf16 %v343, %v342
        %v358 = vpack.c.bf16 %v345, %v344
        %v359 = vpack.c.bf16 %v347, %v346
        %v360 = vpack.c.bf16 %v349, %v348
        %v361 = vpack.c.bf16 %v351, %v350
        %v362 = vpack.c.bf16 %v353, %v352
        %v363 = vpack.c.bf16 %v355, %v354
        %v364 = vld [vmem:[%s1] sm:$0xf]
        %v365 = vld [vmem:[%s1 + $0x4] sm:$0xf]
        %v366 = vld [vmem:[%s1 + $0x8] sm:$0xf]
        %v367 = vld [vmem:[%s1 + $0xc] sm:$0xf]
        %v368 = vld [vmem:[%s1 + $0x10] sm:$0xf]
        %v369 = vld [vmem:[%s1 + $0x14] sm:$0xf]
        %v370 = vld [vmem:[%s1 + $0x18] sm:$0xf]
        %v371 = vld [vmem:[%s1 + $0x1c] sm:$0xf]
        %v372 = vld [vmem:[%s2] sm:$0x1]
        %v374 = vlaneseq
        %v375 = vshrl.u32 %v374, 7
        %v376 = vsub.s32 0, %v375
        %v377 = vrot.slane %v372, %v376
        %v387 = vunpack.c.l.b16 %v364
        %v388 = vunpack.c.l.b16 %v365
        %v389 = vunpack.c.l.b16 %v366
        %v390 = vunpack.c.l.b16 %v367
        %v391 = vunpack.c.l.b16 %v368
        %v392 = vunpack.c.l.b16 %v369
        %v393 = vunpack.c.l.b16 %v370
        %v394 = vunpack.c.l.b16 %v371
        %v395 = vpack.c.b16 %v388, %v387
        %v396 = vpack.c.b16 %v390, %v389
        %v397 = vpack.c.b16 %v392, %v391
        %v398 = vpack.c.b16 %v394, %v393
        %vm403 = vcmask 523264
        %v405 = vsel %vm403, %v356, 0
        %v408 = vsel %vm403, %v357, 0
        %v411 = vsel %vm403, %v358, 0
        %v414 = vsel %vm403, %v359, 0
        %v417 = vsel %vm403, %v360, 0
        %v420 = vsel %vm403, %v361, 0
        %v423 = vsel %vm403, %v362, 0
        %v426 = vsel %vm403, %v363, 0
        %428 = vmatprep.subr.bf16.mxu0 0
        %429 = vmatpush1.bf16.msra.mxu0 %v395
        %430 = vmatprep.subr.bf16.mxu0 0
        %431 = vmatpush1.bf16.msra.mxu0 %v396
        %432 = vmatprep.subr.bf16.mxu0 0
        %433 = vmatpush1.bf16.msra.mxu0 %v397
        %434 = vmatprep.subr.bf16.mxu0 0
        %435 = vmatpush1.bf16.msra.mxu0 %v398
        %436 = vmatprep.subr.bf16.mxu0 0
        %437 = vmatpush1.bf16.msra.mxu0 0
        %438 = vmatprep.subr.bf16.mxu0 0
        %439 = vmatpush1.bf16.msra.mxu0 0
        %440 = vmatprep.subr.bf16.mxu0 0
        %441 = vmatpush1.bf16.msra.mxu0 0
        %442 = vmatprep.subr.bf16.mxu0 0
        %443 = vmatpush1.bf16.msra.mxu0 0
        %444 = vmatprep.subr.bf16.mxu0 0
        %445 = vmatpush1.bf16.msra.mxu0 0
        %446 = vmatprep.subr.bf16.mxu0 0
        %447 = vmatpush1.bf16.msra.mxu0 0
        %448 = vmatprep.subr.bf16.mxu0 0
        %449 = vmatpush1.bf16.msra.mxu0 0
        %450 = vmatprep.subr.bf16.mxu0 0
        %451 = vmatpush1.bf16.msra.mxu0 0
        %452 = vmatprep.subr.bf16.mxu0 0
        %453 = vmatpush1.bf16.msra.mxu0 0
        %454 = vmatprep.subr.bf16.mxu0 0
        %455 = vmatpush1.bf16.msra.mxu0 0
        %456 = vmatprep.subr.bf16.mxu0 0
        %457 = vmatpush1.bf16.msra.mxu0 0
        %458 = vmatprep.subr.bf16.mxu0 0
        %459 = vmatpush1.bf16.msra.mxu0 0
        %460 = vmatprep.mubr.bf16.mxu0 0
        %461 = vmatmul.mubr.bf16.gmra.mrb[0].mxu0 %v405
        %v462 = vpop.f32.mrb[0].mxu0
        %v463 = vadd.f32 %v377, %v462
        %v464 = vpop.f32.mrb[0].mxu0
        %v465 = vpop.f32.mrb[0].mxu0
        %v466 = vadd.f32 %v377, %v465
        %v467 = vpop.f32.mrb[0].mxu0
        %468 = vmatprep.mubr.bf16.mxu0 0
        %469 = vmatmul.mubr.bf16.gmra.mrb[0].mxu0 %v408
        %v470 = vpop.f32.mrb[0].mxu0
        %v471 = vadd.f32 %v377, %v470
        %v472 = vpop.f32.mrb[0].mxu0
        %v473 = vpop.f32.mrb[0].mxu0
        %v474 = vadd.f32 %v377, %v473
        %v475 = vpop.f32.mrb[0].mxu0
        %476 = vmatprep.mubr.bf16.mxu0 0
        %477 = vmatmul.mubr.bf16.gmra.mrb[0].mxu0 %v411
        %v478 = vpop.f32.mrb[0].mxu0
        %v479 = vadd.f32 %v377, %v478
        %v480 = vpop.f32.mrb[0].mxu0
        %v481 = vpop.f32.mrb[0].mxu0
        %v482 = vadd.f32 %v377, %v481
        %v483 = vpop.f32.mrb[0].mxu0
        %484 = vmatprep.mubr.bf16.mxu0 0
        %485 = vmatmul.mubr.bf16.gmra.mrb[0].mxu0 %v414
        %v486 = vpop.f32.mrb[0].mxu0
        %v487 = vadd.f32 %v377, %v486
        %v488 = vpop.f32.mrb[0].mxu0
        %v489 = vpop.f32.mrb[0].mxu0
        %v490 = vadd.f32 %v377, %v489
        %v491 = vpop.f32.mrb[0].mxu0
        %492 = vmatprep.mubr.bf16.mxu0 0
        %493 = vmatmul.mubr.bf16.gmra.mrb[0].mxu0 %v417
        %v494 = vpop.f32.mrb[0].mxu0
        %v495 = vadd.f32 %v377, %v494
        %v496 = vpop.f32.mrb[0].mxu0
        %v497 = vpop.f32.mrb[0].mxu0
        %v498 = vadd.f32 %v377, %v497
        %v499 = vpop.f32.mrb[0].mxu0
        %500 = vmatprep.mubr.bf16.mxu0 0
        %501 = vmatmul.mubr.bf16.gmra.mrb[0].mxu0 %v420
        %v502 = vpop.f32.mrb[0].mxu0
        %v503 = vadd.f32 %v377, %v502
        %v504 = vpop.f32.mrb[0].mxu0
        %v505 = vpop.f32.mrb[0].mxu0
        %v506 = vadd.f32 %v377, %v505
        %v507 = vpop.f32.mrb[0].mxu0
        %508 = vmatprep.mubr.bf16.mxu0 0
        %509 = vmatmul.mubr.bf16.gmra.mrb[0].mxu0 %v423
        %v510 = vpop.f32.mrb[0].mxu0
        %v511 = vadd.f32 %v377, %v510
        %v512 = vpop.f32.mrb[0].mxu0
        %v513 = vpop.f32.mrb[0].mxu0
        %v514 = vadd.f32 %v377, %v513
        %v515 = vpop.f32.mrb[0].mxu0
        %516 = vmatprep.mubr.bf16.mxu0 0
        %517 = vmatmul.mubr.bf16.gmra.mrb[0].mxu0 %v426
        %v518 = vpop.f32.mrb[0].mxu0
        %v519 = vadd.f32 %v377, %v518
        %v520 = vpop.f32.mrb[0].mxu0
        %v521 = vpop.f32.mrb[0].mxu0
        %v522 = vadd.f32 %v377, %v521
        %v523 = vpop.f32.mrb[0].mxu0
        %524 = vdwg.mxu0
        %v525 = vmax.f32 %v463, 0.0
        %v526 = vmax.f32 %v466, 0.0
        %v527 = vmax.f32 %v471, 0.0
        %v528 = vmax.f32 %v474, 0.0
        %v529 = vmax.f32 %v479, 0.0
        %v530 = vmax.f32 %v482, 0.0
        %v531 = vmax.f32 %v487, 0.0
        %v532 = vmax.f32 %v490, 0.0
        %v533 = vmax.f32 %v495, 0.0
        %v534 = vmax.f32 %v498, 0.0
        %v535 = vmax.f32 %v503, 0.0
        %v536 = vmax.f32 %v506, 0.0
        %v537 = vmax.f32 %v511, 0.0
        %v538 = vmax.f32 %v514, 0.0
        %v539 = vmax.f32 %v519, 0.0
        %v540 = vmax.f32 %v522, 0.0
        %v541 = vpack.c.bf16 %v526, %v525
        %v542 = vpack.c.bf16 %v528, %v527
        %v543 = vpack.c.bf16 %v530, %v529
        %v544 = vpack.c.bf16 %v532, %v531
        %v545 = vpack.c.bf16 %v534, %v533
        %v546 = vpack.c.bf16 %v536, %v535
        %v547 = vpack.c.bf16 %v538, %v537
        %v548 = vpack.c.bf16 %v540, %v539
        %v549 = vld [vmem:[%s3] sm:$0xff]
        %v550 = vld [vmem:[%s3 + $0x8] sm:$0xf]
        %v551 = vld [vmem:[%s3 + $0xc] sm:$0xff]
        %v552 = vld [vmem:[%s3 + $0x14] sm:$0xf]
        %v553 = vld [vmem:[%s3 + $0x18] sm:$0xff]
        %v554 = vld [vmem:[%s3 + $0x20] sm:$0xf]
        %v555 = vld [vmem:[%s3 + $0x24] sm:$0xff]
        %v556 = vld [vmem:[%s3 + $0x2c] sm:$0xf]
        %v557 = vld [vmem:[%s4] sm:$0x7]
        %v559 = vlaneseq
        %v560 = vshrl.u32 %v559, 7
        %v561 = vsub.s32 0, %v560
        %v562 = vrot.slane %v557, %v561
        %v563 = vlaneseq
        %v564 = vshrl.u32 %v563, 7
        %v565 = vsub.s32 1, %v564
        %v566 = vrot.slane %v557, %v565
        %v567 = vlaneseq
        %v568 = vshrl.u32 %v567, 7
        %v569 = vsub.s32 2, %v568
        %v570 = vrot.slane %v557, %v569
        %v582 = vunpack.c.l.b16 %v549
        %v583 = vunpack.c.h.b16 %v549
        %v584 = vunpack.c.l.b16 %v550
        %v585 = vunpack.c.l.b16 %v551
        %v586 = vunpack.c.h.b16 %v551
        %v587 = vunpack.c.l.b16 %v552
        %v588 = vunpack.c.l.b16 %v553
        %v589 = vunpack.c.h.b16 %v553
        %v590 = vunpack.c.l.b16 %v554
        %v591 = vunpack.c.l.b16 %v555
        %v592 = vunpack.c.h.b16 %v555
        %v593 = vunpack.c.l.b16 %v556
        %v594 = vpack.c.b16 %v585, %v582
        %v595 = vpack.c.b16 %v586, %v583
        %v596 = vpack.c.b16 %v587, %v584
        %v597 = vpack.c.b16 %v591, %v588
        %v598 = vpack.c.b16 %v592, %v589
        %v599 = vpack.c.b16 %v593, %v590
        %vm606 = vcmask 261120
        %v608 = vsel %vm606, %v541, 0
        %v611 = vsel %vm606, %v542, 0
        %v614 = vsel %vm606, %v543, 0
        %v617 = vsel %vm606, %v544, 0
        %v620 = vsel %vm606, %v545, 0
        %v623 = vsel %vm606, %v546, 0
        %v626 = vsel %vm606, %v547, 0
        %v629 = vsel %vm606, %v548, 0
        %631 = vmatprep.subr.bf16.mxu0 %v595
        %632 = vmatpush1.bf16.msra.mxu0 %v594
        %633 = vmatprep.subr.bf16.mxu0 %v598
        %634 = vmatpush1.bf16.msra.mxu0 %v597
        %635 = vmatprep.subr.bf16.mxu0 0
        %636 = vmatpush1.bf16.msra.mxu0 0
        %637 = vmatprep.subr.bf16.mxu0 0
        %638 = vmatpush1.bf16.msra.mxu0 0
        %639 = vmatprep.subr.bf16.mxu0 0
        %640 = vmatpush1.bf16.msra.mxu0 0
        %641 = vmatprep.subr.bf16.mxu0 0
        %642 = vmatpush1.bf16.msra.mxu0 0
        %643 = vmatprep.subr.bf16.mxu0 0
        %644 = vmatpush1.bf16.msra.mxu0 0
        %645 = vmatprep.subr.bf16.mxu0 0
        %646 = vmatpush1.bf16.msra.mxu0 0
        %647 = vmatprep.subr.bf16.mxu0 0
        %648 = vmatpush1.bf16.msra.mxu0 0
        %649 = vmatprep.subr.bf16.mxu0 0
        %650 = vmatpush1.bf16.msra.mxu0 0
        %651 = vmatprep.subr.bf16.mxu0 0
        %652 = vmatpush1.bf16.msra.mxu0 0
        %653 = vmatprep.subr.bf16.mxu0 0
        %654 = vmatpush1.bf16.msra.mxu0 0
        %655 = vmatprep.subr.bf16.mxu0 0
        %656 = vmatpush1.bf16.msra.mxu0 0
        %657 = vmatprep.subr.bf16.mxu0 0
        %658 = vmatpush1.bf16.msra.mxu0 0
        %659 = vmatprep.subr.bf16.mxu0 0
        %660 = vmatpush1.bf16.msra.mxu0 0
        %661 = vmatprep.subr.bf16.mxu0 0
        %662 = vmatpush1.bf16.msra.mxu0 0
        %663 = vmatprep.mubr.bf16.mxu0 0
        %664 = vmatmul.mubr.bf16.gmra.mrb[0].mxu0 %v608
        %v665 = vpop.f32.mrb[0].mxu0
        %v666 = vadd.f32 %v562, %v665
        %v667 = vpop.f32.mrb[0].mxu0
        %v668 = vadd.f32 %v566, %v667
        %v669 = vpop.f32.mrb[0].mxu0
        %v670 = vadd.f32 %v562, %v669
        %v671 = vpop.f32.mrb[0].mxu0
        %v672 = vadd.f32 %v566, %v671
        %673 = vmatprep.mubr.bf16.mxu0 0
        %674 = vmatmul.mubr.bf16.gmra.mrb[0].mxu0 %v611
        %v675 = vpop.f32.mrb[0].mxu0
        %v676 = vadd.f32 %v562, %v675
        %v677 = vpop.f32.mrb[0].mxu0
        %v678 = vadd.f32 %v566, %v677
        %v679 = vpop.f32.mrb[0].mxu0
        %v680 = vadd.f32 %v562, %v679
        %v681 = vpop.f32.mrb[0].mxu0
        %v682 = vadd.f32 %v566, %v681
        %683 = vmatprep.mubr.bf16.mxu0 0
        %684 = vmatmul.mubr.bf16.gmra.mrb[0].mxu0 %v614
        %v685 = vpop.f32.mrb[0].mxu0
        %v686 = vadd.f32 %v562, %v685
        %v687 = vpop.f32.mrb[0].mxu0
        %v688 = vadd.f32 %v566, %v687
        %v689 = vpop.f32.mrb[0].mxu0
        %v690 = vadd.f32 %v562, %v689
        %v691 = vpop.f32.mrb[0].mxu0
        %v692 = vadd.f32 %v566, %v691
        %693 = vmatprep.mubr.bf16.mxu0 0
        %694 = vmatmul.mubr.bf16.gmra.mrb[0].mxu0 %v617
        %v695 = vpop.f32.mrb[0].mxu0
        %v696 = vadd.f32 %v562, %v695
        %v697 = vpop.f32.mrb[0].mxu0
        %v698 = vadd.f32 %v566, %v697
        %v699 = vpop.f32.mrb[0].mxu0
        %v700 = vadd.f32 %v562, %v699
        %v701 = vpop.f32.mrb[0].mxu0
        %v702 = vadd.f32 %v566, %v701
        %703 = vmatprep.mubr.bf16.mxu0 0
        %704 = vmatmul.mubr.bf16.gmra.mrb[0].mxu0 %v620
        %v705 = vpop.f32.mrb[0].mxu0
        %v706 = vadd.f32 %v562, %v705
        %v707 = vpop.f32.mrb[0].mxu0
        %v708 = vadd.f32 %v566, %v707
        %v709 = vpop.f32.mrb[0].mxu0
        %v710 = vadd.f32 %v562, %v709
        %v711 = vpop.f32.mrb[0].mxu0
        %v712 = vadd.f32 %v566, %v711
        %713 = vmatprep.mubr.bf16.mxu0 0
        %714 = vmatmul.mubr.bf16.gmra.mrb[0].mxu0 %v623
        %v715 = vpop.f32.mrb[0].mxu0
        %v716 = vadd.f32 %v562, %v715
        %v717 = vpop.f32.mrb[0].mxu0
        %v718 = vadd.f32 %v566, %v717
        %v719 = vpop.f32.mrb[0].mxu0
        %v720 = vadd.f32 %v562, %v719
        %v721 = vpop.f32.mrb[0].mxu0
        %v722 = vadd.f32 %v566, %v721
        %723 = vmatprep.mubr.bf16.mxu0 0
        %724 = vmatmul.mubr.bf16.gmra.mrb[0].mxu0 %v626
        %v725 = vpop.f32.mrb[0].mxu0
        %v726 = vadd.f32 %v562, %v725
        %v727 = vpop.f32.mrb[0].mxu0
        %v728 = vadd.f32 %v566, %v727
        %v729 = vpop.f32.mrb[0].mxu0
        %v730 = vadd.f32 %v562, %v729
        %v731 = vpop.f32.mrb[0].mxu0
        %v732 = vadd.f32 %v566, %v731
        %733 = vmatprep.mubr.bf16.mxu0 0
        %734 = vmatmul.mubr.bf16.gmra.mrb[0].mxu0 %v629
        %v735 = vpop.f32.mrb[0].mxu0
        %v736 = vadd.f32 %v562, %v735
        %v737 = vpop.f32.mrb[0].mxu0
        %v738 = vadd.f32 %v566, %v737
        %v739 = vpop.f32.mrb[0].mxu0
        %v740 = vadd.f32 %v562, %v739
        %v741 = vpop.f32.mrb[0].mxu0
        %v742 = vadd.f32 %v566, %v741
        %743 = vdwg.mxu0
        %744 = vmatprep.subr.bf16.mxu0 0
        %745 = vmatpush1.bf16.msra.mxu0 %v596
        %746 = vmatprep.subr.bf16.mxu0 0
        %747 = vmatpush1.bf16.msra.mxu0 %v599
        %748 = vmatprep.subr.bf16.mxu0 0
        %749 = vmatpush1.bf16.msra.mxu0 0
        %750 = vmatprep.subr.bf16.mxu0 0
        %751 = vmatpush1.bf16.msra.mxu0 0
        %752 = vmatprep.subr.bf16.mxu0 0
        %753 = vmatpush1.bf16.msra.mxu0 0
        %754 = vmatprep.subr.bf16.mxu0 0
        %755 = vmatpush1.bf16.msra.mxu0 0
        %756 = vmatprep.subr.bf16.mxu0 0
        %757 = vmatpush1.bf16.msra.mxu0 0
        %758 = vmatprep.subr.bf16.mxu0 0
        %759 = vmatpush1.bf16.msra.mxu0 0
        %760 = vmatprep.subr.bf16.mxu0 0
        %761 = vmatpush1.bf16.msra.mxu0 0
        %762 = vmatprep.subr.bf16.mxu0 0
        %763 = vmatpush1.bf16.msra.mxu0 0
        %764 = vmatprep.subr.bf16.mxu0 0
        %765 = vmatpush1.bf16.msra.mxu0 0
        %766 = vmatprep.subr.bf16.mxu0 0
        %767 = vmatpush1.bf16.msra.mxu0 0
        %768 = vmatprep.subr.bf16.mxu0 0
        %769 = vmatpush1.bf16.msra.mxu0 0
        %770 = vmatprep.subr.bf16.mxu0 0
        %771 = vmatpush1.bf16.msra.mxu0 0
        %772 = vmatprep.subr.bf16.mxu0 0
        %773 = vmatpush1.bf16.msra.mxu0 0
        %774 = vmatprep.subr.bf16.mxu0 0
        %775 = vmatpush1.bf16.msra.mxu0 0
        %776 = vmatprep.mubr.bf16.mxu0 0
        %777 = vmatmul.mubr.bf16.gmra.mrb[0].mxu0 %v608
        %v778 = vpop.f32.mrb[0].mxu0
        %v779 = vadd.f32 %v570, %v778
        %v780 = vpop.f32.mrb[0].mxu0
        %v781 = vpop.f32.mrb[0].mxu0
        %v782 = vadd.f32 %v570, %v781
        %v783 = vpop.f32.mrb[0].mxu0
        %784 = vmatprep.mubr.bf16.mxu0 0
        %785 = vmatmul.mubr.bf16.gmra.mrb[0].mxu0 %v611
        %v786 = vpop.f32.mrb[0].mxu0
        %v787 = vadd.f32 %v570, %v786
        %v788 = vpop.f32.mrb[0].mxu0
        %v789 = vpop.f32.mrb[0].mxu0
        %v790 = vadd.f32 %v570, %v789
        %v791 = vpop.f32.mrb[0].mxu0
        %792 = vmatprep.mubr.bf16.mxu0 0
        %793 = vmatmul.mubr.bf16.gmra.mrb[0].mxu0 %v614
        %v794 = vpop.f32.mrb[0].mxu0
        %v795 = vadd.f32 %v570, %v794
        %v796 = vpop.f32.mrb[0].mxu0
        %v797 = vpop.f32.mrb[0].mxu0
        %v798 = vadd.f32 %v570, %v797
        %v799 = vpop.f32.mrb[0].mxu0
        %800 = vmatprep.mubr.bf16.mxu0 0
        %801 = vmatmul.mubr.bf16.gmra.mrb[0].mxu0 %v617
        %v802 = vpop.f32.mrb[0].mxu0
        %v803 = vadd.f32 %v570, %v802
        %v804 = vpop.f32.mrb[0].mxu0
        %v805 = vpop.f32.mrb[0].mxu0
        %v806 = vadd.f32 %v570, %v805
        %v807 = vpop.f32.mrb[0].mxu0
        %808 = vmatprep.mubr.bf16.mxu0 0
        %809 = vmatmul.mubr.bf16.gmra.mrb[0].mxu0 %v620
        %v810 = vpop.f32.mrb[0].mxu0
        %v811 = vadd.f32 %v570, %v810
        %v812 = vpop.f32.mrb[0].mxu0
        %v813 = vpop.f32.mrb[0].mxu0
        %v814 = vadd.f32 %v570, %v813
        %v815 = vpop.f32.mrb[0].mxu0
        %816 = vmatprep.mubr.bf16.mxu0 0
        %817 = vmatmul.mubr.bf16.gmra.mrb[0].mxu0 %v623
        %v818 = vpop.f32.mrb[0].mxu0
        %v819 = vadd.f32 %v570, %v818
        %v820 = vpop.f32.mrb[0].mxu0
        %v821 = vpop.f32.mrb[0].mxu0
        %v822 = vadd.f32 %v570, %v821
        %v823 = vpop.f32.mrb[0].mxu0
        %824 = vmatprep.mubr.bf16.mxu0 0
        %825 = vmatmul.mubr.bf16.gmra.mrb[0].mxu0 %v626
        %v826 = vpop.f32.mrb[0].mxu0
        %v827 = vadd.f32 %v570, %v826
        %v828 = vpop.f32.mrb[0].mxu0
        %v829 = vpop.f32.mrb[0].mxu0
        %v830 = vadd.f32 %v570, %v829
        %v831 = vpop.f32.mrb[0].mxu0
        %832 = vmatprep.mubr.bf16.mxu0 0
        %833 = vmatmul.mubr.bf16.gmra.mrb[0].mxu0 %v629
        %v834 = vpop.f32.mrb[0].mxu0
        %v835 = vadd.f32 %v570, %v834
        %v836 = vpop.f32.mrb[0].mxu0
        %v837 = vpop.f32.mrb[0].mxu0
        %v838 = vadd.f32 %v570, %v837
        %v839 = vpop.f32.mrb[0].mxu0
        %840 = vdwg.mxu0
        %v841 = vtanh.pop %v666
        %v842 = vtanh.pop %v670
        %v843 = vtanh.pop %v676
        %v844 = vtanh.pop %v680
        %v845 = vtanh.pop %v686
        %v846 = vtanh.pop %v690
        %v847 = vtanh.pop %v696
        %v848 = vtanh.pop %v700
        %v849 = vtanh.pop %v706
        %v850 = vtanh.pop %v710
        %v851 = vtanh.pop %v716
        %v852 = vtanh.pop %v720
        %v853 = vtanh.pop %v726
        %v854 = vtanh.pop %v730
        %v855 = vtanh.pop %v736
        %v856 = vtanh.pop %v740
        %v857 = vxor.u32 %v668, 2147483648
        %v858 = vxor.u32 %v672, 2147483648
        %v859 = vxor.u32 %v678, 2147483648
        %v860 = vxor.u32 %v682, 2147483648
        %v861 = vxor.u32 %v688, 2147483648
        %v862 = vxor.u32 %v692, 2147483648
        %v863 = vxor.u32 %v698, 2147483648
        %v864 = vxor.u32 %v702, 2147483648
        %v865 = vxor.u32 %v708, 2147483648
        %v866 = vxor.u32 %v712, 2147483648
        %v867 = vxor.u32 %v718, 2147483648
        %v868 = vxor.u32 %v722, 2147483648
        %v869 = vxor.u32 %v728, 2147483648
        %v870 = vxor.u32 %v732, 2147483648
        %v871 = vxor.u32 %v738, 2147483648
        %v872 = vxor.u32 %v742, 2147483648
        %v873 = vmul.f32 %v857, 1.442695
        %v874 = vpow.pop %v873
        %v875 = vmul.f32 %v858, 1.442695
        %v876 = vpow.pop %v875
        %v877 = vmul.f32 %v859, 1.442695
        %v878 = vpow.pop %v877
        %v879 = vmul.f32 %v860, 1.442695
        %v880 = vpow.pop %v879
        %v881 = vmul.f32 %v861, 1.442695
        %v882 = vpow.pop %v881
        %v883 = vmul.f32 %v862, 1.442695
        %v884 = vpow.pop %v883
        %v885 = vmul.f32 %v863, 1.442695
        %v886 = vpow.pop %v885
        %v887 = vmul.f32 %v864, 1.442695
        %v888 = vpow.pop %v887
        %v889 = vmul.f32 %v865, 1.442695
        %v890 = vpow.pop %v889
        %v891 = vmul.f32 %v866, 1.442695
        %v892 = vpow.pop %v891
        %v893 = vmul.f32 %v867, 1.442695
        %v894 = vpow.pop %v893
        %v895 = vmul.f32 %v868, 1.442695
        %v896 = vpow.pop %v895
        %v897 = vmul.f32 %v869, 1.442695
        %v898 = vpow.pop %v897
        %v899 = vmul.f32 %v870, 1.442695
        %v900 = vpow.pop %v899
        %v901 = vmul.f32 %v871, 1.442695
        %v902 = vpow.pop %v901
        %v903 = vmul.f32 %v872, 1.442695
        %v904 = vpow.pop %v903
        %v905 = vadd.f32 %v874, 1.0
        %v906 = vadd.f32 %v876, 1.0
        %v907 = vadd.f32 %v878, 1.0
        %v908 = vadd.f32 %v880, 1.0
        %v909 = vadd.f32 %v882, 1.0
        %v910 = vadd.f32 %v884, 1.0
        %v911 = vadd.f32 %v886, 1.0
        %v912 = vadd.f32 %v888, 1.0
        %v913 = vadd.f32 %v890, 1.0
        %v914 = vadd.f32 %v892, 1.0
        %v915 = vadd.f32 %v894, 1.0
        %v916 = vadd.f32 %v896, 1.0
        %v917 = vadd.f32 %v898, 1.0
        %v918 = vadd.f32 %v900, 1.0
        %v919 = vadd.f32 %v902, 1.0
        %v920 = vadd.f32 %v904, 1.0
        %v921 = vrcp.pop %v905
        %v922 = vmul.f32 1.0, %v921
        %v923 = vrcp.pop %v906
        %v924 = vmul.f32 1.0, %v923
        %v925 = vrcp.pop %v907
        %v926 = vmul.f32 1.0, %v925
        %v927 = vrcp.pop %v908
        %v928 = vmul.f32 1.0, %v927
        %v929 = vrcp.pop %v909
        %v930 = vmul.f32 1.0, %v929
        %v931 = vrcp.pop %v910
        %v932 = vmul.f32 1.0, %v931
        %v933 = vrcp.pop %v911
        %v934 = vmul.f32 1.0, %v933
        %v935 = vrcp.pop %v912
        %v936 = vmul.f32 1.0, %v935
        %v937 = vrcp.pop %v913
        %v938 = vmul.f32 1.0, %v937
        %v939 = vrcp.pop %v914
        %v940 = vmul.f32 1.0, %v939
        %v941 = vrcp.pop %v915
        %v942 = vmul.f32 1.0, %v941
        %v943 = vrcp.pop %v916
        %v944 = vmul.f32 1.0, %v943
        %v945 = vrcp.pop %v917
        %v946 = vmul.f32 1.0, %v945
        %v947 = vrcp.pop %v918
        %v948 = vmul.f32 1.0, %v947
        %v949 = vrcp.pop %v919
        %v950 = vmul.f32 1.0, %v949
        %v951 = vrcp.pop %v920
        %v952 = vmul.f32 1.0, %v951
        %v953 = vmul.f32 %v841, %v922
        %v954 = vmul.f32 %v842, %v924
        %v955 = vmul.f32 %v843, %v926
        %v956 = vmul.f32 %v844, %v928
        %v957 = vmul.f32 %v845, %v930
        %v958 = vmul.f32 %v846, %v932
        %v959 = vmul.f32 %v847, %v934
        %v960 = vmul.f32 %v848, %v936
        %v961 = vmul.f32 %v849, %v938
        %v962 = vmul.f32 %v850, %v940
        %v963 = vmul.f32 %v851, %v942
        %v964 = vmul.f32 %v852, %v944
        %v965 = vmul.f32 %v853, %v946
        %v966 = vmul.f32 %v854, %v948
        %v967 = vmul.f32 %v855, %v950
        %v968 = vmul.f32 %v856, %v952
        %v969 = vld [vmem:[%s5] sm:$0x1]
        %v971 = vlaneseq
        %v972 = vshrl.u32 %v971, 7
        %v973 = vsub.s32 0, %v972
        %v974 = vrot.slane %v969, %v973
        %v976 = vmul.f32 %v953, %v974
        %v977 = vmul.f32 %v954, %v974
        %v978 = vmul.f32 %v955, %v974
        %v979 = vmul.f32 %v956, %v974
        %v980 = vmul.f32 %v957, %v974
        %v981 = vmul.f32 %v958, %v974
        %v982 = vmul.f32 %v959, %v974
        %v983 = vmul.f32 %v960, %v974
        %v984 = vmul.f32 %v961, %v974
        %v985 = vmul.f32 %v962, %v974
        %v986 = vmul.f32 %v963, %v974
        %v987 = vmul.f32 %v964, %v974
        %v988 = vmul.f32 %v965, %v974
        %v989 = vmul.f32 %v966, %v974
        %v990 = vmul.f32 %v967, %v974
        %v991 = vmul.f32 %v968, %v974
        %vm992 = vcmask 130048
        %v993 = vsel %vm992, %v976, 0.0
        %994 = vadd.xlane.f32.xlu0 %v993
        %v995 = vpop.xlane.xlu0 %994
        %v996 = vsel %vm992, %v977, 0.0
        %997 = vadd.xlane.f32.xlu0 %v996
        %v998 = vpop.xlane.xlu0 %997
        %v999 = vsel %vm992, %v978, 0.0
        %1000 = vadd.xlane.f32.xlu0 %v999
        %v1001 = vpop.xlane.xlu0 %1000
        %v1002 = vsel %vm992, %v979, 0.0
        %1003 = vadd.xlane.f32.xlu0 %v1002
        %v1004 = vpop.xlane.xlu0 %1003
        %v1005 = vsel %vm992, %v980, 0.0
        %1006 = vadd.xlane.f32.xlu0 %v1005
        %v1007 = vpop.xlane.xlu0 %1006
        %v1008 = vsel %vm992, %v981, 0.0
        %1009 = vadd.xlane.f32.xlu0 %v1008
        %v1010 = vpop.xlane.xlu0 %1009
        %v1011 = vsel %vm992, %v982, 0.0
        %1012 = vadd.xlane.f32.xlu0 %v1011
        %v1013 = vpop.xlane.xlu0 %1012
        %v1014 = vsel %vm992, %v983, 0.0
        %1015 = vadd.xlane.f32.xlu0 %v1014
        %v1016 = vpop.xlane.xlu0 %1015
        %v1017 = vsel %vm992, %v984, 0.0
        %1018 = vadd.xlane.f32.xlu0 %v1017
        %v1019 = vpop.xlane.xlu0 %1018
        %v1020 = vsel %vm992, %v985, 0.0
        %1021 = vadd.xlane.f32.xlu0 %v1020
        %v1022 = vpop.xlane.xlu0 %1021
        %v1023 = vsel %vm992, %v986, 0.0
        %1024 = vadd.xlane.f32.xlu0 %v1023
        %v1025 = vpop.xlane.xlu0 %1024
        %v1026 = vsel %vm992, %v987, 0.0
        %1027 = vadd.xlane.f32.xlu0 %v1026
        %v1028 = vpop.xlane.xlu0 %1027
        %v1029 = vsel %vm992, %v988, 0.0
        %1030 = vadd.xlane.f32.xlu0 %v1029
        %v1031 = vpop.xlane.xlu0 %1030
        %v1032 = vsel %vm992, %v989, 0.0
        %1033 = vadd.xlane.f32.xlu0 %v1032
        %v1034 = vpop.xlane.xlu0 %1033
        %v1035 = vsel %vm992, %v990, 0.0
        %1036 = vadd.xlane.f32.xlu0 %v1035
        %v1037 = vpop.xlane.xlu0 %1036
        %v1038 = vsel %vm992, %v991, 0.0
        %1039 = vadd.xlane.f32.xlu0 %v1038
        %v1040 = vpop.xlane.xlu0 %1039
        %v1041 = vld [vmem:[#allocation2] sm:$0x1]
        %v1043 = vlaneseq
        %v1044 = vshrl.u32 %v1043, 7
        %v1045 = vsub.s32 0, %v1044
        %v1046 = vrot.slane %v1041, %v1045
        %v1048 = vadd.f32 %v995, %v1046
        %v1049 = vadd.f32 %v998, %v1046
        %v1050 = vadd.f32 %v1001, %v1046
        %v1051 = vadd.f32 %v1004, %v1046
        %v1052 = vadd.f32 %v1007, %v1046
        %v1053 = vadd.f32 %v1010, %v1046
        %v1054 = vadd.f32 %v1013, %v1046
        %v1055 = vadd.f32 %v1016, %v1046
        %v1056 = vadd.f32 %v1019, %v1046
        %v1057 = vadd.f32 %v1022, %v1046
        %v1058 = vadd.f32 %v1025, %v1046
        %v1059 = vadd.f32 %v1028, %v1046
        %v1060 = vadd.f32 %v1031, %v1046
        %v1061 = vadd.f32 %v1034, %v1046
        %v1062 = vadd.f32 %v1037, %v1046
        %v1063 = vadd.f32 %v1040, %v1046
        %v1064 = vxor.u32 %v1048, 2147483648
        %v1065 = vxor.u32 %v1049, 2147483648
        %v1066 = vxor.u32 %v1050, 2147483648
        %v1067 = vxor.u32 %v1051, 2147483648
        %v1068 = vxor.u32 %v1052, 2147483648
        %v1069 = vxor.u32 %v1053, 2147483648
        %v1070 = vxor.u32 %v1054, 2147483648
        %v1071 = vxor.u32 %v1055, 2147483648
        %v1072 = vxor.u32 %v1056, 2147483648
        %v1073 = vxor.u32 %v1057, 2147483648
        %v1074 = vxor.u32 %v1058, 2147483648
        %v1075 = vxor.u32 %v1059, 2147483648
        %v1076 = vxor.u32 %v1060, 2147483648
        %v1077 = vxor.u32 %v1061, 2147483648
        %v1078 = vxor.u32 %v1062, 2147483648
        %v1079 = vxor.u32 %v1063, 2147483648
        %v1080 = vmul.f32 %v1064, 1.442695
        %v1081 = vpow.pop %v1080
        %v1082 = vmul.f32 %v1065, 1.442695
        %v1083 = vpow.pop %v1082
        %v1084 = vmul.f32 %v1066, 1.442695
        %v1085 = vpow.pop %v1084
        %v1086 = vmul.f32 %v1067, 1.442695
        %v1087 = vpow.pop %v1086
        %v1088 = vmul.f32 %v1068, 1.442695
        %v1089 = vpow.pop %v1088
        %v1090 = vmul.f32 %v1069, 1.442695
        %v1091 = vpow.pop %v1090
        %v1092 = vmul.f32 %v1070, 1.442695
        %v1093 = vpow.pop %v1092
        %v1094 = vmul.f32 %v1071, 1.442695
        %v1095 = vpow.pop %v1094
        %v1096 = vmul.f32 %v1072, 1.442695
        %v1097 = vpow.pop %v1096
        %v1098 = vmul.f32 %v1073, 1.442695
        %v1099 = vpow.pop %v1098
        %v1100 = vmul.f32 %v1074, 1.442695
        %v1101 = vpow.pop %v1100
        %v1102 = vmul.f32 %v1075, 1.442695
        %v1103 = vpow.pop %v1102
        %v1104 = vmul.f32 %v1076, 1.442695
        %v1105 = vpow.pop %v1104
        %v1106 = vmul.f32 %v1077, 1.442695
        %v1107 = vpow.pop %v1106
        %v1108 = vmul.f32 %v1078, 1.442695
        %v1109 = vpow.pop %v1108
        %v1110 = vmul.f32 %v1079, 1.442695
        %v1111 = vpow.pop %v1110
        %v1112 = vadd.f32 %v1081, 1.0
        %v1113 = vadd.f32 %v1083, 1.0
        %v1114 = vadd.f32 %v1085, 1.0
        %v1115 = vadd.f32 %v1087, 1.0
        %v1116 = vadd.f32 %v1089, 1.0
        %v1117 = vadd.f32 %v1091, 1.0
        %v1118 = vadd.f32 %v1093, 1.0
        %v1119 = vadd.f32 %v1095, 1.0
        %v1120 = vadd.f32 %v1097, 1.0
        %v1121 = vadd.f32 %v1099, 1.0
        %v1122 = vadd.f32 %v1101, 1.0
        %v1123 = vadd.f32 %v1103, 1.0
        %v1124 = vadd.f32 %v1105, 1.0
        %v1125 = vadd.f32 %v1107, 1.0
        %v1126 = vadd.f32 %v1109, 1.0
        %v1127 = vadd.f32 %v1111, 1.0
        %v1128 = vrcp.pop %v1112
        %v1129 = vmul.f32 1.0, %v1128
        %v1130 = vrcp.pop %v1113
        %v1131 = vmul.f32 1.0, %v1130
        %v1132 = vrcp.pop %v1114
        %v1133 = vmul.f32 1.0, %v1132
        %v1134 = vrcp.pop %v1115
        %v1135 = vmul.f32 1.0, %v1134
        %v1136 = vrcp.pop %v1116
        %v1137 = vmul.f32 1.0, %v1136
        %v1138 = vrcp.pop %v1117
        %v1139 = vmul.f32 1.0, %v1138
        %v1140 = vrcp.pop %v1118
        %v1141 = vmul.f32 1.0, %v1140
        %v1142 = vrcp.pop %v1119
        %v1143 = vmul.f32 1.0, %v1142
        %v1144 = vrcp.pop %v1120
        %v1145 = vmul.f32 1.0, %v1144
        %v1146 = vrcp.pop %v1121
        %v1147 = vmul.f32 1.0, %v1146
        %v1148 = vrcp.pop %v1122
        %v1149 = vmul.f32 1.0, %v1148
        %v1150 = vrcp.pop %v1123
        %v1151 = vmul.f32 1.0, %v1150
        %v1152 = vrcp.pop %v1124
        %v1153 = vmul.f32 1.0, %v1152
        %v1154 = vrcp.pop %v1125
        %v1155 = vmul.f32 1.0, %v1154
        %v1156 = vrcp.pop %v1126
        %v1157 = vmul.f32 1.0, %v1156
        %v1158 = vrcp.pop %v1127
        %v1159 = vmul.f32 1.0, %v1158
        %1160 = vxpose.xlu0.b32.start [1/16] %v1048, 128
        %1161 = vxpose.xlu0.b32.cont [2/16] %v1049, 128
        %1162 = vxpose.xlu0.b32.cont [3/16] %v1050, 128
        %1163 = vxpose.xlu0.b32.cont [4/16] %v1051, 128
        %1164 = vxpose.xlu0.b32.cont [5/16] %v1052, 128
        %1165 = vxpose.xlu0.b32.cont [6/16] %v1053, 128
        %1166 = vxpose.xlu0.b32.cont [7/16] %v1054, 128
        %1167 = vxpose.xlu0.b32.cont [8/16] %v1055, 128
        %1168 = vxpose.xlu0.b32.cont [9/16] %v1056, 128
        %1169 = vxpose.xlu0.b32.cont [10/16] %v1057, 128
        %1170 = vxpose.xlu0.b32.cont [11/16] %v1058, 128
        %1171 = vxpose.xlu0.b32.cont [12/16] %v1059, 128
        %1172 = vxpose.xlu0.b32.cont [13/16] %v1060, 128
        %1173 = vxpose.xlu0.b32.cont [14/16] %v1061, 128
        %1174 = vxpose.xlu0.b32.cont [15/16] %v1062, 128
        %1175 = vxpose.xlu0.b32.end [16/16] %v1063, 128
        %v1176 = vpop.trf.xlu0
        %v1177 = vpop.trf.xlu0
        %v1178 = vpop.trf.xlu0
        %v1179 = vpop.trf.xlu0
        %v1180 = vpop.trf.xlu0
        %v1181 = vpop.trf.xlu0
        %v1182 = vpop.trf.xlu0
        %v1183 = vpop.trf.xlu0
        %v1184 = vpop.trf.xlu0
        %v1185 = vpop.trf.xlu0
        %v1186 = vpop.trf.xlu0
        %v1187 = vpop.trf.xlu0
        %v1188 = vpop.trf.xlu0
        %v1189 = vpop.trf.xlu0
        %v1190 = vpop.trf.xlu0
        %v1191 = vpop.trf.xlu0
        %1192 = vxpose.xlu0.b32.start [1/16] %v1129, 128
        %1193 = vxpose.xlu0.b32.cont [2/16] %v1131, 128
        %1194 = vxpose.xlu0.b32.cont [3/16] %v1133, 128
        %1195 = vxpose.xlu0.b32.cont [4/16] %v1135, 128
        %1196 = vxpose.xlu0.b32.cont [5/16] %v1137, 128
        %1197 = vxpose.xlu0.b32.cont [6/16] %v1139, 128
        %1198 = vxpose.xlu0.b32.cont [7/16] %v1141, 128
        %1199 = vxpose.xlu0.b32.cont [8/16] %v1143, 128
        %1200 = vxpose.xlu0.b32.cont [9/16] %v1145, 128
        %1201 = vxpose.xlu0.b32.cont [10/16] %v1147, 128
        %1202 = vxpose.xlu0.b32.cont [11/16] %v1149, 128
        %1203 = vxpose.xlu0.b32.cont [12/16] %v1151, 128
        %1204 = vxpose.xlu0.b32.cont [13/16] %v1153, 128
        %1205 = vxpose.xlu0.b32.cont [14/16] %v1155, 128
        %1206 = vxpose.xlu0.b32.cont [15/16] %v1157, 128
        %1207 = vxpose.xlu0.b32.end [16/16] %v1159, 128
        %v1208 = vpop.trf.xlu0
        %v1209 = vpop.trf.xlu0
        %v1210 = vpop.trf.xlu0
        %v1211 = vpop.trf.xlu0
        %v1212 = vpop.trf.xlu0
        %v1213 = vpop.trf.xlu0
        %v1214 = vpop.trf.xlu0
        %v1215 = vpop.trf.xlu0
        %v1216 = vpop.trf.xlu0
        %v1217 = vpop.trf.xlu0
        %v1218 = vpop.trf.xlu0
        %v1219 = vpop.trf.xlu0
        %v1220 = vpop.trf.xlu0
        %v1221 = vpop.trf.xlu0
        %v1222 = vpop.trf.xlu0
        %v1223 = vpop.trf.xlu0
        %v1225 = vrot.slane %v1208, 7
        %vm1227 = vcmask 1040384
        %v1228 = vsel %vm1227, %v1176, %v1225
        %1229 = vst [vmem:[%s317] sm:$0x3] %v1228
        %1230 = vxpose.xlu0.b32.start [1/16] %v779, 128
        %1231 = vxpose.xlu0.b32.cont [2/16] %v782, 128
        %1232 = vxpose.xlu0.b32.cont [3/16] %v787, 128
        %1233 = vxpose.xlu0.b32.cont [4/16] %v790, 128
        %1234 = vxpose.xlu0.b32.cont [5/16] %v795, 128
        %1235 = vxpose.xlu0.b32.cont [6/16] %v798, 128
        %1236 = vxpose.xlu0.b32.cont [7/16] %v803, 128
        %1237 = vxpose.xlu0.b32.cont [8/16] %v806, 128
        %1238 = vxpose.xlu0.b32.cont [9/16] %v811, 128
        %1239 = vxpose.xlu0.b32.cont [10/16] %v814, 128
        %1240 = vxpose.xlu0.b32.cont [11/16] %v819, 128
        %1241 = vxpose.xlu0.b32.cont [12/16] %v822, 128
        %1242 = vxpose.xlu0.b32.cont [13/16] %v827, 128
        %1243 = vxpose.xlu0.b32.cont [14/16] %v830, 128
        %1244 = vxpose.xlu0.b32.cont [15/16] %v835, 128
        %1245 = vxpose.xlu0.b32.end [16/16] %v838, 128
        %v1246 = vpop.trf.xlu0
        %v1247 = vpop.trf.xlu0
        %v1248 = vpop.trf.xlu0
        %v1249 = vpop.trf.xlu0
        %v1250 = vpop.trf.xlu0
        %v1251 = vpop.trf.xlu0
        %v1252 = vpop.trf.xlu0
        %v1253 = vpop.trf.xlu0
        %v1254 = vpop.trf.xlu0
        %v1255 = vpop.trf.xlu0
        %v1256 = vpop.trf.xlu0
        %v1257 = vpop.trf.xlu0
        %v1258 = vpop.trf.xlu0
        %v1259 = vpop.trf.xlu0
        %v1260 = vpop.trf.xlu0
        %v1261 = vpop.trf.xlu0
        %1262 = vst [vmem:[%s324] sm:$0x3] %v1246
        %s1263 = sand.u32 %s188, 1
        %s1264 = scalar_lea.sflag [#allocation4], %s1263
        %s1265 = sand.u32 %s188, 1
        %s1266 = smul.addr %s1265, 2
        %s1267 = scalar_lea.vmem [#allocation3], %s1266
        %s1268 = sand.u32 %s214, 1
        %s1269 = scalar_lea.sflag [#allocation6], %s1268
        %s1270 = sand.u32 %s214, 1
        %s1271 = smul.addr %s1270, 2
        %s1272 = scalar_lea.vmem [#allocation5], %s1271
        // Predicated region
        $region49: #{tpu_custom_call.1} parent=47 // pred_check
          %p1273 = pneg %p198
        $region50: #{tpu_custom_call.1} parent=47 // pred_check_branch
          %1275 = sbr.rel (%p1273) target = $region52
        $region51: #{tpu_custom_call.1} parent=47 // pred_region
          %s1277 = ssub.s32 32, 32
          %1278 = vsyncadd %s1264, %s1277
          %s1279 = smul.addr %s28, 32
          %s1280 = scalar_lea.hbm %s7, %s1279
          %s1282 = sshll.u32 %s1267, 4
          %s1283 = int_to_ptr.vmem [resolvable:$true] %s1282
          %1285 = dma.vmem_to_hbm [thread:$0]  %s1283, 32, %s1280, %s1264
        $region52: #{tpu_custom_call.1} parent=47 // pred_fallthru
          _
        // Predicated region
        $region53: #{tpu_custom_call.1} parent=47 // pred_check
          %p1286 = pneg %p224
        $region54: #{tpu_custom_call.1} parent=47 // pred_check_branch
          %1288 = sbr.rel (%p1286) target = $region56
        $region55: #{tpu_custom_call.1} parent=47 // pred_region
          %s1290 = ssub.s32 32, 32
          %1291 = vsyncadd %s1269, %s1290
          %s1292 = smul.addr %s28, 32
          %s1293 = scalar_lea.hbm %s8, %s1292
          %s1295 = sshll.u32 %s1272, 4
          %s1296 = int_to_ptr.vmem [resolvable:$true] %s1295
          %1298 = dma.vmem_to_hbm [thread:$0]  %s1296, 32, %s1293, %s1269
        $region56: #{tpu_custom_call.1} parent=47 // pred_fallthru
          _
      $region48: #{tpu_custom_call.1} parent=5 // pred_fallthru
        _
      %p1299 = scmp.le.s32.totalorder 2, %s23
      // Predicated region
      $region57: #{tpu_custom_call.1} parent=5 // pred_check
        %p1300 = pneg %p1299
      $region58: #{tpu_custom_call.1} parent=5 // pred_check_branch
        %1302 = sbr.rel (%p1300) target = $region60
      $region59: #{tpu_custom_call.1} parent=5 // pred_region
        %s1303 = ssub.s32 %s23, 2
        // Predicated region
        $region61: #{tpu_custom_call.1} parent=59 // pred_check
          %p1304 = pneg %p204
        $region62: #{tpu_custom_call.1} parent=59 // pred_check_branch
          %1306 = sbr.rel (%p1304) target = $region64
        $region63: #{tpu_custom_call.1} parent=59 // pred_region
          %s1307 = sand.u32 %s189, 1
          %s1308 = scalar_lea.sflag [#allocation4], %s1307
          %s1309 = sand.u32 %s189, 1
          %s1310 = smul.addr %s1309, 2
          %s1311 = scalar_lea.vmem [#allocation3], %s1310
          %1312 = dma.done %s1308, 32
        $region64: #{tpu_custom_call.1} parent=59 // pred_fallthru
          _
        // Predicated region
        $region65: #{tpu_custom_call.1} parent=59 // pred_check
          %p1313 = pneg %p230
        $region66: #{tpu_custom_call.1} parent=59 // pred_check_branch
          %1315 = sbr.rel (%p1313) target = $region68
        $region67: #{tpu_custom_call.1} parent=59 // pred_region
          %s1316 = sand.u32 %s215, 1
          %s1317 = scalar_lea.sflag [#allocation6], %s1316
          %s1318 = sand.u32 %s215, 1
          %s1319 = smul.addr %s1318, 2
          %s1320 = scalar_lea.vmem [#allocation5], %s1319
          %1321 = dma.done %s1317, 32
        $region68: #{tpu_custom_call.1} parent=59 // pred_fallthru
          _
      $region60: #{tpu_custom_call.1} parent=5 // pred_fallthru
        _
    $region6: #{tpu_custom_call.1} parent=1 // loop_footer
      %s27 = sadd.s32 1, %s23
    $region7: #{tpu_custom_call.1} parent=1 // loop_footer_branch
      %22 = sbr.rel target = $region3
    $region8: #{tpu_custom_call.1} parent=1 // loop_exit
      _
    %1322 = vsyncpa [#allocation4], 1
    %s1323 = scalar_lea.sflag [#allocation4], 1
    %1324 = vsyncpa %s1323, 1
    %1325 = vsyncpa [#allocation6], 1
    %s1326 = scalar_lea.sflag [#allocation6], 1
    %1327 = vsyncpa %s1326, 1

// kernel: tpu_custom_call.1
$region0: #{tpu_custom_call.1}
  #allocation0 [shape = 'u32[]', space=smem, size = 0x4, offset = 0x4, fixed_abs, tag = 'smem constant byte address 0x4 - core index']
  #allocation1 [shape = 'u32[144,128]{1,0:T(1,128)}', space=vmem, size = 0x12000, scoped, tag = 'internal scratch']
  #allocation2 [shape = 'f32[1,1]{1,0:T(1,128)S(1)}', space=vmem, size = 0x200, scoped, tag = 'scoped memory for tpu_custom_call.1']
  %s0 = inlined_call_operand.vmem [shape: f32[300,64], index: 0, kind: input, shape index: {}]
  %s1 = inlined_call_operand.vmem [shape: bf16[64,32], index: 1, kind: input, shape index: {}]
  %s2 = inlined_call_operand.vmem [shape: f32[1,32], index: 2, kind: input, shape index: {}]
  %s3 = inlined_call_operand.vmem [shape: bf16[32,384], index: 3, kind: input, shape index: {}]
  %s4 = inlined_call_operand.vmem [shape: f32[1,384], index: 4, kind: input, shape index: {}]
  %s5 = inlined_call_operand.vmem [shape: f32[1,16], index: 5, kind: input, shape index: {}]
  %s6 = inlined_call_operand.<no memory space> [shape: f32[1,1], index: 6, kind: input, shape index: {}]
  %s7 = inlined_call_operand.hbm [shape: f32[3,2,128], index: 7, kind: output, shape index: {0}]
  %s8 = inlined_call_operand.hbm [shape: f32[3,2,128], index: 8, kind: output, shape index: {1}]
  %9 = xla_tuple %s7, %s8
  %s10 = sld [smem:[#allocation0]]
  $region69: #{tpu_custom_call.1} parent=0
    _
  %s12 = ssub.s32 1, %s10
  %s13 = scalar_select 0, %s12, %s10
  %v14 = vstv %s6
  %15 = vst [vmem:[#allocation2] sm:$0x1] %v14
  $region1: #{tpu_custom_call.1} parent=0
    #allocation3 [shape = 'u8[2048]{0}', space=vmem, size = 0x800, scoped, tag = 'output window, operand 0']
    #allocation4 [shape = 's32[2]{0}', space=sflag, size = 0x8, scoped, tag = 'scoped memory for tpu_custom_call.1']
    #allocation5 [shape = 'u8[2048]{0}', space=vmem, size = 0x800, scoped, tag = 'output window, operand 1']
    #allocation6 [shape = 's32[2]{0}', space=sflag, size = 0x8, scoped, tag = 'scoped memory for tpu_custom_call.1']
    %16 = vsyncpa [#allocation4], 0
    %s17 = scalar_lea.sflag [#allocation4], 1
    %18 = vsyncpa %s17, 0
    %19 = vsyncpa [#allocation6], 0
    %s20 = scalar_lea.sflag [#allocation6], 1
    %21 = vsyncpa %s20, 0
    loop: start=0, step=1, limit=5
    $region2: #{tpu_custom_call.1} parent=1 // loop_pre_header
      _
    $region3: #{tpu_custom_call.1} parent=1 // loop_header
      %s23 = sphi 0, %s27
      %p24 = scmp.ge.s32.totalorder %s23, 5
      %s33 = sphi 0, %s35
      %s36 = sphi 0, %s33
      %s37 = sphi 0, %s36
      %s53 = sphi 0, %s37
      %s57 = sphi 0, %s57
      %s59 = sphi 0, %s57
      %s60 = sphi 0, %s59
      %s74 = sphi 0, %s60
      %s78 = sphi 0, %s78
      %s80 = sphi 0, %s78
      %s81 = sphi 0, %s80
      %s95 = sphi 0, %s81
      %s99 = sphi 0, %s99
      %s101 = sphi 0, %s99
      %s102 = sphi 0, %s101
      %s116 = sphi 0, %s102
      %s120 = sphi 0, %s120
      %s122 = sphi 0, %s120
      %s123 = sphi 0, %s122
      %s137 = sphi 0, %s123
      %s141 = sphi 0, %s141
      %s143 = sphi 0, %s141
      %s144 = sphi 0, %s143
      %s158 = sphi 0, %s144
      %s162 = sphi 0, %s162
      %s164 = sphi 0, %s162
      %s165 = sphi 0, %s164
      %s179 = sphi 0, %s165
      %s185 = sphi 0, %s187
      %s188 = sphi 0, %s185
      %s189 = sphi 0, %s188
      %s205 = sphi 0, %s189
      %s211 = sphi 0, %s213
      %s214 = sphi 0, %s211
      %s215 = sphi 0, %s214
      %s231 = sphi 0, %s215
    $region4: #{tpu_custom_call.1} parent=1 // loop_header_branch
      %26 = sbr.rel (%p24) target = $region8
    $region5: #{tpu_custom_call.1} parent=1 // loop_body
      %s28 = ssub.s32 %s23, 1
      %s29 = ssub.s32 %s23, 2
      %s30 = sadd.s32 %s23, 1
      %s31 = ssub.s32 %s23, %s30
      %p32 = scmp.eq.s32.totalorder %s31, 0
      %s34 = sadd.s32 %s33, 1
      %s35 = scalar_select %p32, %s33, %s34
      %p38 = pneg %p32
      %p39 = scmp.eq.s32.totalorder %s23, 2
      %p40 = por %p38, %p39
      %p41 = scmp.ne.s32.totalorder %s33, %s36
      %p42 = scmp.eq.s32.totalorder %s23, 0
      %p43 = por %p41, %p42
      %p44 = scmp.ne.s32.totalorder %s33, %s36
      %p45 = scmp.eq.s32.totalorder %s28, 2
      %p46 = por %p44, %p45
      %p47 = scmp.ne.s32.totalorder %s36, %s37
      %p48 = scmp.eq.s32.totalorder %s28, 0
      %p49 = por %p47, %p48
      %p50 = scmp.ne.s32.totalorder %s36, %s37
      %p51 = scmp.eq.s32.totalorder %s29, 2
      %p52 = por %p50, %p51
      %p54 = scmp.ne.s32.totalorder %s37, %s53
      %p55 = scmp.eq.s32.totalorder %s29, 0
      %p56 = por %p54, %p55
      %s58 = sadd.s32 %s57, 1
      %p61 = scmp.eq.s32.totalorder %s23, 2
      %p62 = scmp.ne.s32.totalorder %s57, %s59
      %p63 = scmp.eq.s32.totalorder %s23, 0
      %p64 = por %p62, %p63
      %p65 = scmp.ne.s32.totalorder %s57, %s59
      %p66 = scmp.eq.s32.totalorder %s28, 2
      %p67 = por %p65, %p66
      %p68 = scmp.ne.s32.totalorder %s59, %s60
      %p69 = scmp.eq.s32.totalorder %s28, 0
      %p70 = por %p68, %p69
      %p71 = scmp.ne.s32.totalorder %s59, %s60
      %p72 = scmp.eq.s32.totalorder %s29, 2
      %p73 = por %p71, %p72
      %p75 = scmp.ne.s32.totalorder %s60, %s74
      %p76 = scmp.eq.s32.totalorder %s29, 0
      %p77 = por %p75, %p76
      %s79 = sadd.s32 %s78, 1
      %p82 = scmp.eq.s32.totalorder %s23, 2
      %p83 = scmp.ne.s32.totalorder %s78, %s80
      %p84 = scmp.eq.s32.totalorder %s23, 0
      %p85 = por %p83, %p84
      %p86 = scmp.ne.s32.totalorder %s78, %s80
      %p87 = scmp.eq.s32.totalorder %s28, 2
      %p88 = por %p86, %p87
      %p89 = scmp.ne.s32.totalorder %s80, %s81
      %p90 = scmp.eq.s32.totalorder %s28, 0
      %p91 = por %p89, %p90
      %p92 = scmp.ne.s32.totalorder %s80, %s81
      %p93 = scmp.eq.s32.totalorder %s29, 2
      %p94 = por %p92, %p93
      %p96 = scmp.ne.s32.totalorder %s81, %s95
      %p97 = scmp.eq.s32.totalorder %s29, 0
      %p98 = por %p96, %p97
      %s100 = sadd.s32 %s99, 1
      %p103 = scmp.eq.s32.totalorder %s23, 2
      %p104 = scmp.ne.s32.totalorder %s99, %s101
      %p105 = scmp.eq.s32.totalorder %s23, 0
      %p106 = por %p104, %p105
      %p107 = scmp.ne.s32.totalorder %s99, %s101
      %p108 = scmp.eq.s32.totalorder %s28, 2
      %p109 = por %p107, %p108
      %p110 = scmp.ne.s32.totalorder %s101, %s102
      %p111 = scmp.eq.s32.totalorder %s28, 0
      %p112 = por %p110, %p111
      %p113 = scmp.ne.s32.totalorder %s101, %s102
      %p114 = scmp.eq.s32.totalorder %s29, 2
      %p115 = por %p113, %p114
      %p117 = scmp.ne.s32.totalorder %s102, %s116
      %p118 = scmp.eq.s32.totalorder %s29, 0
      %p119 = por %p117, %p118
      %s121 = sadd.s32 %s120, 1
      %p124 = scmp.eq.s32.totalorder %s23, 2
      %p125 = scmp.ne.s32.totalorder %s120, %s122
      %p126 = scmp.eq.s32.totalorder %s23, 0
      %p127 = por %p125, %p126
      %p128 = scmp.ne.s32.totalorder %s120, %s122
      %p129 = scmp.eq.s32.totalorder %s28, 2
      %p130 = por %p128, %p129
      %p131 = scmp.ne.s32.totalorder %s122, %s123
      %p132 = scmp.eq.s32.totalorder %s28, 0
      %p133 = por %p131, %p132
      %p134 = scmp.ne.s32.totalorder %s122, %s123
      %p135 = scmp.eq.s32.totalorder %s29, 2
      %p136 = por %p134, %p135
      %p138 = scmp.ne.s32.totalorder %s123, %s137
      %p139 = scmp.eq.s32.totalorder %s29, 0
      %p140 = por %p138, %p139
      %s142 = sadd.s32 %s141, 1
      %p145 = scmp.eq.s32.totalorder %s23, 2
      %p146 = scmp.ne.s32.totalorder %s141, %s143
      %p147 = scmp.eq.s32.totalorder %s23, 0
      %p148 = por %p146, %p147
      %p149 = scmp.ne.s32.totalorder %s141, %s143
      %p150 = scmp.eq.s32.totalorder %s28, 2
      %p151 = por %p149, %p150
      %p152 = scmp.ne.s32.totalorder %s143, %s144
      %p153 = scmp.eq.s32.totalorder %s28, 0
      %p154 = por %p152, %p153
      %p155 = scmp.ne.s32.totalorder %s143, %s144
      %p156 = scmp.eq.s32.totalorder %s29, 2
      %p157 = por %p155, %p156
      %p159 = scmp.ne.s32.totalorder %s144, %s158
      %p160 = scmp.eq.s32.totalorder %s29, 0
      %p161 = por %p159, %p160
      %s163 = sadd.s32 %s162, 1
      %p166 = scmp.eq.s32.totalorder %s23, 2
      %p167 = scmp.ne.s32.totalorder %s162, %s164
      %p168 = scmp.eq.s32.totalorder %s23, 0
      %p169 = por %p167, %p168
      %p170 = scmp.ne.s32.totalorder %s162, %s164
      %p171 = scmp.eq.s32.totalorder %s28, 2
      %p172 = por %p170, %p171
      %p173 = scmp.ne.s32.totalorder %s164, %s165
      %p174 = scmp.eq.s32.totalorder %s28, 0
      %p175 = por %p173, %p174
      %p176 = scmp.ne.s32.totalorder %s164, %s165
      %p177 = scmp.eq.s32.totalorder %s29, 2
      %p178 = por %p176, %p177
      %p180 = scmp.ne.s32.totalorder %s165, %s179
      %p181 = scmp.eq.s32.totalorder %s29, 0
      %p182 = por %p180, %p181
      %s183 = ssub.s32 %s23, %s30
      %p184 = scmp.eq.s32.totalorder %s183, 0
      %s186 = sadd.s32 %s185, 1
      %s187 = scalar_select %p184, %s185, %s186
      %p190 = pneg %p184
      %p191 = scmp.eq.s32.totalorder %s23, 2
      %p192 = por %p190, %p191
      %p193 = scmp.ne.s32.totalorder %s185, %s188
      %p194 = scmp.eq.s32.totalorder %s23, 0
      %p195 = por %p193, %p194
      %p196 = scmp.ne.s32.totalorder %s185, %s188
      %p197 = scmp.eq.s32.totalorder %s28, 2
      %p198 = por %p196, %p197
      %p199 = scmp.ne.s32.totalorder %s188, %s189
      %p200 = scmp.eq.s32.totalorder %s28, 0
      %p201 = por %p199, %p200
      %p202 = scmp.ne.s32.totalorder %s188, %s189
      %p203 = scmp.eq.s32.totalorder %s29, 2
      %p204 = por %p202, %p203
      %p206 = scmp.ne.s32.totalorder %s189, %s205
      %p207 = scmp.eq.s32.totalorder %s29, 0
      %p208 = por %p206, %p207
      %s209 = ssub.s32 %s23, %s30
      %p210 = scmp.eq.s32.totalorder %s209, 0
      %s212 = sadd.s32 %s211, 1
      %s213 = scalar_select %p210, %s211, %s212
      %p216 = pneg %p210
      %p217 = scmp.eq.s32.totalorder %s23, 2
      %p218 = por %p216, %p217
      %p219 = scmp.ne.s32.totalorder %s211, %s214
      %p220 = scmp.eq.s32.totalorder %s23, 0
      %p221 = por %p219, %p220
      %p222 = scmp.ne.s32.totalorder %s211, %s214
      %p223 = scmp.eq.s32.totalorder %s28, 2
      %p224 = por %p222, %p223
      %p225 = scmp.ne.s32.totalorder %s214, %s215
      %p226 = scmp.eq.s32.totalorder %s28, 0
      %p227 = por %p225, %p226
      %p228 = scmp.ne.s32.totalorder %s214, %s215
      %p229 = scmp.eq.s32.totalorder %s29, 2
      %p230 = por %p228, %p229
      %p232 = scmp.ne.s32.totalorder %s215, %s231
      %p233 = scmp.eq.s32.totalorder %s29, 0
      %p234 = por %p232, %p233
      %p235 = scmp.le.s32.totalorder 1, %s23
      %p236 = scmp.lt.s32.totalorder %s23, 4
      %p237 = pnand %p235, %p236
      %p238 = pneg %p237
      // Predicated region
      $region9: #{tpu_custom_call.1} parent=5 // pred_check
        _
      $region10: #{tpu_custom_call.1} parent=5 // pred_check_branch
        %240 = sbr.rel (%p237) target = $region12
      $region11: #{tpu_custom_call.1} parent=5 // pred_region
        %s241 = ssub.s32 %s23, 1
        // Predicated region
        $region13: #{tpu_custom_call.1} parent=11 // pred_check
          %p242 = pneg %p70
        $region14: #{tpu_custom_call.1} parent=11 // pred_check_branch
          %244 = sbr.rel (%p242) target = $region16
        $region15: #{tpu_custom_call.1} parent=11 // pred_region
          _
        $region16: #{tpu_custom_call.1} parent=11 // pred_fallthru
          _
        // Predicated region
        $region17: #{tpu_custom_call.1} parent=11 // pred_check
          %p245 = pneg %p91
        $region18: #{tpu_custom_call.1} parent=11 // pred_check_branch
          %247 = sbr.rel (%p245) target = $region20
        $region19: #{tpu_custom_call.1} parent=11 // pred_region
          _
        $region20: #{tpu_custom_call.1} parent=11 // pred_fallthru
          _
        // Predicated region
        $region21: #{tpu_custom_call.1} parent=11 // pred_check
          %p248 = pneg %p112
        $region22: #{tpu_custom_call.1} parent=11 // pred_check_branch
          %250 = sbr.rel (%p248) target = $region24
        $region23: #{tpu_custom_call.1} parent=11 // pred_region
          _
        $region24: #{tpu_custom_call.1} parent=11 // pred_fallthru
          _
        // Predicated region
        $region25: #{tpu_custom_call.1} parent=11 // pred_check
          %p251 = pneg %p133
        $region26: #{tpu_custom_call.1} parent=11 // pred_check_branch
          %253 = sbr.rel (%p251) target = $region28
        $region27: #{tpu_custom_call.1} parent=11 // pred_region
          _
        $region28: #{tpu_custom_call.1} parent=11 // pred_fallthru
          _
        // Predicated region
        $region29: #{tpu_custom_call.1} parent=11 // pred_check
          %p254 = pneg %p154
        $region30: #{tpu_custom_call.1} parent=11 // pred_check_branch
          %256 = sbr.rel (%p254) target = $region32
        $region31: #{tpu_custom_call.1} parent=11 // pred_region
          _
        $region32: #{tpu_custom_call.1} parent=11 // pred_fallthru
          _
        // Predicated region
        $region33: #{tpu_custom_call.1} parent=11 // pred_check
          %p257 = pneg %p175
        $region34: #{tpu_custom_call.1} parent=11 // pred_check_branch
          %259 = sbr.rel (%p257) target = $region36
        $region35: #{tpu_custom_call.1} parent=11 // pred_region
          _
        $region36: #{tpu_custom_call.1} parent=11 // pred_fallthru
          _
      $region12: #{tpu_custom_call.1} parent=5 // pred_fallthru
        _
      %p260 = scmp.lt.s32.totalorder %s23, 3
      // Predicated region
      $region37: #{tpu_custom_call.1} parent=5 // pred_check
        %p261 = pneg %p260
      $region38: #{tpu_custom_call.1} parent=5 // pred_check_branch
        %263 = sbr.rel (%p261) target = $region40
      $region39: #{tpu_custom_call.1} parent=5 // pred_region
        // Predicated region
        $region41: #{tpu_custom_call.1} parent=39 // pred_check
          %p264 = pneg %p43
        $region42: #{tpu_custom_call.1} parent=39 // pred_check_branch
          %266 = sbr.rel (%p264) target = $region44
        $region43: #{tpu_custom_call.1} parent=39 // pred_region
          %s267 = smul.u32 16, %s23
          %s268 = ssub.s32 38, %s267
          %p269 = scmp.lt.s32.totalorder %s268, 16
          %s270 = scalar_select %p269, %s268, 16
          %s271 = smul.u32 128, %s270
          %p272 = scmp.lt.s32.totalorder %s267, 37
          %s273 = scalar_select %p272, %s267, 37
          %s274 = smul.addr %s273, 8
          %s275 = scalar_lea.vmem %s0, %s274
          %s276 = smul.u32 16, %s23
          %s277 = ssub.s32 38, %s276
          %p278 = scmp.lt.s32.totalorder %s277, 16
          %s279 = scalar_select %p278, %s277, 16
          %s280 = smul.u32 128, %s279
        $region44: #{tpu_custom_call.1} parent=39 // pred_fallthru
          _
      $region40: #{tpu_custom_call.1} parent=5 // pred_fallthru
        _
      %p281 = scmp.le.s32.totalorder 1, %s23
      %p282 = scmp.lt.s32.totalorder %s23, 4
      %p283 = pnand %p281, %p282
      %p284 = pneg %p283
      // Predicated region
      $region45: #{tpu_custom_call.1} parent=5 // pred_check
        _
      $region46: #{tpu_custom_call.1} parent=5 // pred_check_branch
        %286 = sbr.rel (%p283) target = $region48
      $region47: #{tpu_custom_call.1} parent=5 // pred_region
        %s287 = ssub.s32 %s23, 1
        %s288 = smul.u32 16, %s28
        %s289 = ssub.s32 38, %s288
        %p290 = scmp.lt.s32.totalorder %s289, 16
        %s291 = scalar_select %p290, %s289, 16
        %s292 = smul.u32 128, %s291
        %p293 = scmp.lt.s32.totalorder %s288, 37
        %s294 = scalar_select %p293, %s288, 37
        %s295 = smul.addr %s294, 8
        %s296 = scalar_lea.vmem %s0, %s295
        %p297 = pneg %p49
        %p298 = pneg %p46
        %p299 = pneg %p70
        %p300 = pneg %p67
        %p301 = pneg %p91
        %p302 = pneg %p88
        %p303 = pneg %p112
        %p304 = pneg %p109
        %p305 = pneg %p133
        %p306 = pneg %p130
        %p307 = pneg %p154
        %p308 = pneg %p151
        %p309 = pneg %p175
        %p310 = pneg %p172
        %p311 = pneg %p201
        %p312 = pneg %p198
        %s313 = sand.u32 %s188, 1
        %s314 = scalar_lea.sflag [#allocation4], %s313
        %s315 = sand.u32 %s188, 1
        %s316 = smul.addr %s315, 2
        %s317 = scalar_lea.vmem [#allocation3], %s316
        %p318 = pneg %p227
        %p319 = pneg %p224
        %s320 = sand.u32 %s214, 1
        %s321 = scalar_lea.sflag [#allocation6], %s320
        %s322 = sand.u32 %s214, 1
        %s323 = smul.addr %s322, 2
        %s324 = scalar_lea.vmem [#allocation5], %s323
        %s325 = smul.u32 16, %s28
        %s326 = ssub.s32 38, %s325
        %p327 = scmp.lt.s32.totalorder %s326, 16
        %s328 = scalar_select %p327, %s326, 16
        %s329 = smul.u32 128, %s328
        %p330 = scmp.lt.s32.totalorder %s325, 37
        %s331 = scalar_select %p330, %s325, 37
        %s332 = smul.addr %s331, 8
        %s333 = scalar_lea.vmem %s0, %s332
        %s334 = smul.u32 16, %s28
        %s335 = ssub.s32 38, %s334
        %p336 = scmp.lt.s32.totalorder %s335, 16
        %s337 = scalar_select %p336, %s335, 16
        %s338 = smul.u32 128, %s337
        %v340 = vld [vmem:[%s333] sm:$0xff]
        %v341 = vld [vmem:[%s333 + $0x8] sm:$0xff]
        %v342 = vld [vmem:[%s333 + $0x10] sm:$0xff]
        %v343 = vld [vmem:[%s333 + $0x18] sm:$0xff]
        %v344 = vld [vmem:[%s333 + $0x20] sm:$0xff]
        %v345 = vld [vmem:[%s333 + $0x28] sm:$0xff]
        %v346 = vld [vmem:[%s333 + $0x30] sm:$0xff]
        %v347 = vld [vmem:[%s333 + $0x38] sm:$0xff]
        %v348 = vld [vmem:[%s333 + $0x40] sm:$0xff]
        %v349 = vld [vmem:[%s333 + $0x48] sm:$0xff]
        %v350 = vld [vmem:[%s333 + $0x50] sm:$0xff]
        %v351 = vld [vmem:[%s333 + $0x58] sm:$0xff]
        %v352 = vld [vmem:[%s333 + $0x60] sm:$0xff]
        %v353 = vld [vmem:[%s333 + $0x68] sm:$0xff]
        %v354 = vld [vmem:[%s333 + $0x70] sm:$0xff]
        %v355 = vld [vmem:[%s333 + $0x78] sm:$0xff]
        %v356 = vpack.c.bf16 %v341, %v340
        %v357 = vpack.c.bf16 %v343, %v342
        %v358 = vpack.c.bf16 %v345, %v344
        %v359 = vpack.c.bf16 %v347, %v346
        %v360 = vpack.c.bf16 %v349, %v348
        %v361 = vpack.c.bf16 %v351, %v350
        %v362 = vpack.c.bf16 %v353, %v352
        %v363 = vpack.c.bf16 %v355, %v354
        %v364 = vld [vmem:[%s1] sm:$0xf]
        %v365 = vld [vmem:[%s1 + $0x4] sm:$0xf]
        %v366 = vld [vmem:[%s1 + $0x8] sm:$0xf]
        %v367 = vld [vmem:[%s1 + $0xc] sm:$0xf]
        %v368 = vld [vmem:[%s1 + $0x10] sm:$0xf]
        %v369 = vld [vmem:[%s1 + $0x14] sm:$0xf]
        %v370 = vld [vmem:[%s1 + $0x18] sm:$0xf]
        %v371 = vld [vmem:[%s1 + $0x1c] sm:$0xf]
        %v372 = vld [vmem:[%s2] sm:$0x1]
        %v374 = vlaneseq
        %v375 = vshrl.u32 %v374, 7
        %v376 = vsub.s32 0, %v375
        %v377 = vrot.slane %v372, %v376
        %v387 = vunpack.c.l.b16 %v364
        %v388 = vunpack.c.l.b16 %v365
        %v389 = vunpack.c.l.b16 %v366
        %v390 = vunpack.c.l.b16 %v367
        %v391 = vunpack.c.l.b16 %v368
        %v392 = vunpack.c.l.b16 %v369
        %v393 = vunpack.c.l.b16 %v370
        %v394 = vunpack.c.l.b16 %v371
        %v395 = vpack.c.b16 %v388, %v387
        %v396 = vpack.c.b16 %v390, %v389
        %v397 = vpack.c.b16 %v392, %v391
        %v398 = vpack.c.b16 %v394, %v393
        %vm403 = vcmask 523264
        %v405 = vsel %vm403, %v356, 0
        %v408 = vsel %vm403, %v357, 0
        %v411 = vsel %vm403, %v358, 0
        %v414 = vsel %vm403, %v359, 0
        %v417 = vsel %vm403, %v360, 0
        %v420 = vsel %vm403, %v361, 0
        %v423 = vsel %vm403, %v362, 0
        %v426 = vsel %vm403, %v363, 0
        %428 = vmatprep.subr.bf16.mxu0 0
        %429 = vmatpush1.bf16.msra.mxu0 %v395
        %430 = vmatprep.subr.bf16.mxu0 0
        %431 = vmatpush1.bf16.msra.mxu0 %v396
        %432 = vmatprep.subr.bf16.mxu0 0
        %433 = vmatpush1.bf16.msra.mxu0 %v397
        %434 = vmatprep.subr.bf16.mxu0 0
        %435 = vmatpush1.bf16.msra.mxu0 %v398
        %436 = vmatprep.subr.bf16.mxu0 0
        %437 = vmatpush1.bf16.msra.mxu0 0
        %438 = vmatprep.subr.bf16.mxu0 0
        %439 = vmatpush1.bf16.msra.mxu0 0
        %440 = vmatprep.subr.bf16.mxu0 0
        %441 = vmatpush1.bf16.msra.mxu0 0
        %442 = vmatprep.subr.bf16.mxu0 0
        %443 = vmatpush1.bf16.msra.mxu0 0
        %444 = vmatprep.subr.bf16.mxu0 0
        %445 = vmatpush1.bf16.msra.mxu0 0
        %446 = vmatprep.subr.bf16.mxu0 0
        %447 = vmatpush1.bf16.msra.mxu0 0
        %448 = vmatprep.subr.bf16.mxu0 0
        %449 = vmatpush1.bf16.msra.mxu0 0
        %450 = vmatprep.subr.bf16.mxu0 0
        %451 = vmatpush1.bf16.msra.mxu0 0
        %452 = vmatprep.subr.bf16.mxu0 0
        %453 = vmatpush1.bf16.msra.mxu0 0
        %454 = vmatprep.subr.bf16.mxu0 0
        %455 = vmatpush1.bf16.msra.mxu0 0
        %456 = vmatprep.subr.bf16.mxu0 0
        %457 = vmatpush1.bf16.msra.mxu0 0
        %458 = vmatprep.subr.bf16.mxu0 0
        %459 = vmatpush1.bf16.msra.mxu0 0
        %460 = vmatprep.mubr.bf16.mxu0 0
        %461 = vmatmul.mubr.bf16.gmra.mrb[0].mxu0 %v405
        %v462 = vpop.f32.mrb[0].mxu0
        %v463 = vadd.f32 %v377, %v462
        %v464 = vpop.f32.mrb[0].mxu0
        %v465 = vpop.f32.mrb[0].mxu0
        %v466 = vadd.f32 %v377, %v465
        %v467 = vpop.f32.mrb[0].mxu0
        %468 = vmatprep.mubr.bf16.mxu0 0
        %469 = vmatmul.mubr.bf16.gmra.mrb[0].mxu0 %v408
        %v470 = vpop.f32.mrb[0].mxu0
        %v471 = vadd.f32 %v377, %v470
        %v472 = vpop.f32.mrb[0].mxu0
        %v473 = vpop.f32.mrb[0].mxu0
        %v474 = vadd.f32 %v377, %v473
        %v475 = vpop.f32.mrb[0].mxu0
        %476 = vmatprep.mubr.bf16.mxu0 0
        %477 = vmatmul.mubr.bf16.gmra.mrb[0].mxu0 %v411
        %v478 = vpop.f32.mrb[0].mxu0
        %v479 = vadd.f32 %v377, %v478
        %v480 = vpop.f32.mrb[0].mxu0
        %v481 = vpop.f32.mrb[0].mxu0
        %v482 = vadd.f32 %v377, %v481
        %v483 = vpop.f32.mrb[0].mxu0
        %484 = vmatprep.mubr.bf16.mxu0 0
        %485 = vmatmul.mubr.bf16.gmra.mrb[0].mxu0 %v414
        %v486 = vpop.f32.mrb[0].mxu0
        %v487 = vadd.f32 %v377, %v486
        %v488 = vpop.f32.mrb[0].mxu0
        %v489 = vpop.f32.mrb[0].mxu0
        %v490 = vadd.f32 %v377, %v489
        %v491 = vpop.f32.mrb[0].mxu0
        %492 = vmatprep.mubr.bf16.mxu0 0
        %493 = vmatmul.mubr.bf16.gmra.mrb[0].mxu0 %v417
        %v494 = vpop.f32.mrb[0].mxu0
        %v495 = vadd.f32 %v377, %v494
        %v496 = vpop.f32.mrb[0].mxu0
        %v497 = vpop.f32.mrb[0].mxu0
        %v498 = vadd.f32 %v377, %v497
        %v499 = vpop.f32.mrb[0].mxu0
        %500 = vmatprep.mubr.bf16.mxu0 0
        %501 = vmatmul.mubr.bf16.gmra.mrb[0].mxu0 %v420
        %v502 = vpop.f32.mrb[0].mxu0
        %v503 = vadd.f32 %v377, %v502
        %v504 = vpop.f32.mrb[0].mxu0
        %v505 = vpop.f32.mrb[0].mxu0
        %v506 = vadd.f32 %v377, %v505
        %v507 = vpop.f32.mrb[0].mxu0
        %508 = vmatprep.mubr.bf16.mxu0 0
        %509 = vmatmul.mubr.bf16.gmra.mrb[0].mxu0 %v423
        %v510 = vpop.f32.mrb[0].mxu0
        %v511 = vadd.f32 %v377, %v510
        %v512 = vpop.f32.mrb[0].mxu0
        %v513 = vpop.f32.mrb[0].mxu0
        %v514 = vadd.f32 %v377, %v513
        %v515 = vpop.f32.mrb[0].mxu0
        %516 = vmatprep.mubr.bf16.mxu0 0
        %517 = vmatmul.mubr.bf16.gmra.mrb[0].mxu0 %v426
        %v518 = vpop.f32.mrb[0].mxu0
        %v519 = vadd.f32 %v377, %v518
        %v520 = vpop.f32.mrb[0].mxu0
        %v521 = vpop.f32.mrb[0].mxu0
        %v522 = vadd.f32 %v377, %v521
        %v523 = vpop.f32.mrb[0].mxu0
        %524 = vdwg.mxu0
        %v525 = vmax.f32 %v463, 0.0
        %v526 = vmax.f32 %v466, 0.0
        %v527 = vmax.f32 %v471, 0.0
        %v528 = vmax.f32 %v474, 0.0
        %v529 = vmax.f32 %v479, 0.0
        %v530 = vmax.f32 %v482, 0.0
        %v531 = vmax.f32 %v487, 0.0
        %v532 = vmax.f32 %v490, 0.0
        %v533 = vmax.f32 %v495, 0.0
        %v534 = vmax.f32 %v498, 0.0
        %v535 = vmax.f32 %v503, 0.0
        %v536 = vmax.f32 %v506, 0.0
        %v537 = vmax.f32 %v511, 0.0
        %v538 = vmax.f32 %v514, 0.0
        %v539 = vmax.f32 %v519, 0.0
        %v540 = vmax.f32 %v522, 0.0
        %v541 = vpack.c.bf16 %v526, %v525
        %v542 = vpack.c.bf16 %v528, %v527
        %v543 = vpack.c.bf16 %v530, %v529
        %v544 = vpack.c.bf16 %v532, %v531
        %v545 = vpack.c.bf16 %v534, %v533
        %v546 = vpack.c.bf16 %v536, %v535
        %v547 = vpack.c.bf16 %v538, %v537
        %v548 = vpack.c.bf16 %v540, %v539
        %v549 = vld [vmem:[%s3] sm:$0xff]
        %v550 = vld [vmem:[%s3 + $0x8] sm:$0xf]
        %v551 = vld [vmem:[%s3 + $0xc] sm:$0xff]
        %v552 = vld [vmem:[%s3 + $0x14] sm:$0xf]
        %v553 = vld [vmem:[%s3 + $0x18] sm:$0xff]
        %v554 = vld [vmem:[%s3 + $0x20] sm:$0xf]
        %v555 = vld [vmem:[%s3 + $0x24] sm:$0xff]
        %v556 = vld [vmem:[%s3 + $0x2c] sm:$0xf]
        %v557 = vld [vmem:[%s4] sm:$0x7]
        %v559 = vlaneseq
        %v560 = vshrl.u32 %v559, 7
        %v561 = vsub.s32 0, %v560
        %v562 = vrot.slane %v557, %v561
        %v563 = vlaneseq
        %v564 = vshrl.u32 %v563, 7
        %v565 = vsub.s32 1, %v564
        %v566 = vrot.slane %v557, %v565
        %v567 = vlaneseq
        %v568 = vshrl.u32 %v567, 7
        %v569 = vsub.s32 2, %v568
        %v570 = vrot.slane %v557, %v569
        %v582 = vunpack.c.l.b16 %v549
        %v583 = vunpack.c.h.b16 %v549
        %v584 = vunpack.c.l.b16 %v550
        %v585 = vunpack.c.l.b16 %v551
        %v586 = vunpack.c.h.b16 %v551
        %v587 = vunpack.c.l.b16 %v552
        %v588 = vunpack.c.l.b16 %v553
        %v589 = vunpack.c.h.b16 %v553
        %v590 = vunpack.c.l.b16 %v554
        %v591 = vunpack.c.l.b16 %v555
        %v592 = vunpack.c.h.b16 %v555
        %v593 = vunpack.c.l.b16 %v556
        %v594 = vpack.c.b16 %v585, %v582
        %v595 = vpack.c.b16 %v586, %v583
        %v596 = vpack.c.b16 %v587, %v584
        %v597 = vpack.c.b16 %v591, %v588
        %v598 = vpack.c.b16 %v592, %v589
        %v599 = vpack.c.b16 %v593, %v590
        %vm606 = vcmask 261120
        %v608 = vsel %vm606, %v541, 0
        %v611 = vsel %vm606, %v542, 0
        %v614 = vsel %vm606, %v543, 0
        %v617 = vsel %vm606, %v544, 0
        %v620 = vsel %vm606, %v545, 0
        %v623 = vsel %vm606, %v546, 0
        %v626 = vsel %vm606, %v547, 0
        %v629 = vsel %vm606, %v548, 0
        %631 = vmatprep.subr.bf16.mxu0 %v595
        %632 = vmatpush1.bf16.msra.mxu0 %v594
        %633 = vmatprep.subr.bf16.mxu0 %v598
        %634 = vmatpush1.bf16.msra.mxu0 %v597
        %635 = vmatprep.subr.bf16.mxu0 0
        %636 = vmatpush1.bf16.msra.mxu0 0
        %637 = vmatprep.subr.bf16.mxu0 0
        %638 = vmatpush1.bf16.msra.mxu0 0
        %639 = vmatprep.subr.bf16.mxu0 0
        %640 = vmatpush1.bf16.msra.mxu0 0
        %641 = vmatprep.subr.bf16.mxu0 0
        %642 = vmatpush1.bf16.msra.mxu0 0
        %643 = vmatprep.subr.bf16.mxu0 0
        %644 = vmatpush1.bf16.msra.mxu0 0
        %645 = vmatprep.subr.bf16.mxu0 0
        %646 = vmatpush1.bf16.msra.mxu0 0
        %647 = vmatprep.subr.bf16.mxu0 0
        %648 = vmatpush1.bf16.msra.mxu0 0
        %649 = vmatprep.subr.bf16.mxu0 0
        %650 = vmatpush1.bf16.msra.mxu0 0
        %651 = vmatprep.subr.bf16.mxu0 0
        %652 = vmatpush1.bf16.msra.mxu0 0
        %653 = vmatprep.subr.bf16.mxu0 0
        %654 = vmatpush1.bf16.msra.mxu0 0
        %655 = vmatprep.subr.bf16.mxu0 0
        %656 = vmatpush1.bf16.msra.mxu0 0
        %657 = vmatprep.subr.bf16.mxu0 0
        %658 = vmatpush1.bf16.msra.mxu0 0
        %659 = vmatprep.subr.bf16.mxu0 0
        %660 = vmatpush1.bf16.msra.mxu0 0
        %661 = vmatprep.subr.bf16.mxu0 0
        %662 = vmatpush1.bf16.msra.mxu0 0
        %663 = vmatprep.mubr.bf16.mxu0 0
        %664 = vmatmul.mubr.bf16.gmra.mrb[0].mxu0 %v608
        %v665 = vpop.f32.mrb[0].mxu0
        %v666 = vadd.f32 %v562, %v665
        %v667 = vpop.f32.mrb[0].mxu0
        %v668 = vadd.f32 %v566, %v667
        %v669 = vpop.f32.mrb[0].mxu0
        %v670 = vadd.f32 %v562, %v669
        %v671 = vpop.f32.mrb[0].mxu0
        %v672 = vadd.f32 %v566, %v671
        %673 = vmatprep.mubr.bf16.mxu0 0
        %674 = vmatmul.mubr.bf16.gmra.mrb[0].mxu0 %v611
        %v675 = vpop.f32.mrb[0].mxu0
        %v676 = vadd.f32 %v562, %v675
        %v677 = vpop.f32.mrb[0].mxu0
        %v678 = vadd.f32 %v566, %v677
        %v679 = vpop.f32.mrb[0].mxu0
        %v680 = vadd.f32 %v562, %v679
        %v681 = vpop.f32.mrb[0].mxu0
        %v682 = vadd.f32 %v566, %v681
        %683 = vmatprep.mubr.bf16.mxu0 0
        %684 = vmatmul.mubr.bf16.gmra.mrb[0].mxu0 %v614
        %v685 = vpop.f32.mrb[0].mxu0
        %v686 = vadd.f32 %v562, %v685
        %v687 = vpop.f32.mrb[0].mxu0
        %v688 = vadd.f32 %v566, %v687
        %v689 = vpop.f32.mrb[0].mxu0
        %v690 = vadd.f32 %v562, %v689
        %v691 = vpop.f32.mrb[0].mxu0
        %v692 = vadd.f32 %v566, %v691
        %693 = vmatprep.mubr.bf16.mxu0 0
        %694 = vmatmul.mubr.bf16.gmra.mrb[0].mxu0 %v617
        %v695 = vpop.f32.mrb[0].mxu0
        %v696 = vadd.f32 %v562, %v695
        %v697 = vpop.f32.mrb[0].mxu0
        %v698 = vadd.f32 %v566, %v697
        %v699 = vpop.f32.mrb[0].mxu0
        %v700 = vadd.f32 %v562, %v699
        %v701 = vpop.f32.mrb[0].mxu0
        %v702 = vadd.f32 %v566, %v701
        %703 = vmatprep.mubr.bf16.mxu0 0
        %704 = vmatmul.mubr.bf16.gmra.mrb[0].mxu0 %v620
        %v705 = vpop.f32.mrb[0].mxu0
        %v706 = vadd.f32 %v562, %v705
        %v707 = vpop.f32.mrb[0].mxu0
        %v708 = vadd.f32 %v566, %v707
        %v709 = vpop.f32.mrb[0].mxu0
        %v710 = vadd.f32 %v562, %v709
        %v711 = vpop.f32.mrb[0].mxu0
        %v712 = vadd.f32 %v566, %v711
        %713 = vmatprep.mubr.bf16.mxu0 0
        %714 = vmatmul.mubr.bf16.gmra.mrb[0].mxu0 %v623
        %v715 = vpop.f32.mrb[0].mxu0
        %v716 = vadd.f32 %v562, %v715
        %v717 = vpop.f32.mrb[0].mxu0
        %v718 = vadd.f32 %v566, %v717
        %v719 = vpop.f32.mrb[0].mxu0
        %v720 = vadd.f32 %v562, %v719
        %v721 = vpop.f32.mrb[0].mxu0
        %v722 = vadd.f32 %v566, %v721
        %723 = vmatprep.mubr.bf16.mxu0 0
        %724 = vmatmul.mubr.bf16.gmra.mrb[0].mxu0 %v626
        %v725 = vpop.f32.mrb[0].mxu0
        %v726 = vadd.f32 %v562, %v725
        %v727 = vpop.f32.mrb[0].mxu0
        %v728 = vadd.f32 %v566, %v727
        %v729 = vpop.f32.mrb[0].mxu0
        %v730 = vadd.f32 %v562, %v729
        %v731 = vpop.f32.mrb[0].mxu0
        %v732 = vadd.f32 %v566, %v731
        %733 = vmatprep.mubr.bf16.mxu0 0
        %734 = vmatmul.mubr.bf16.gmra.mrb[0].mxu0 %v629
        %v735 = vpop.f32.mrb[0].mxu0
        %v736 = vadd.f32 %v562, %v735
        %v737 = vpop.f32.mrb[0].mxu0
        %v738 = vadd.f32 %v566, %v737
        %v739 = vpop.f32.mrb[0].mxu0
        %v740 = vadd.f32 %v562, %v739
        %v741 = vpop.f32.mrb[0].mxu0
        %v742 = vadd.f32 %v566, %v741
        %743 = vdwg.mxu0
        %744 = vmatprep.subr.bf16.mxu0 0
        %745 = vmatpush1.bf16.msra.mxu0 %v596
        %746 = vmatprep.subr.bf16.mxu0 0
        %747 = vmatpush1.bf16.msra.mxu0 %v599
        %748 = vmatprep.subr.bf16.mxu0 0
        %749 = vmatpush1.bf16.msra.mxu0 0
        %750 = vmatprep.subr.bf16.mxu0 0
        %751 = vmatpush1.bf16.msra.mxu0 0
        %752 = vmatprep.subr.bf16.mxu0 0
        %753 = vmatpush1.bf16.msra.mxu0 0
        %754 = vmatprep.subr.bf16.mxu0 0
        %755 = vmatpush1.bf16.msra.mxu0 0
        %756 = vmatprep.subr.bf16.mxu0 0
        %757 = vmatpush1.bf16.msra.mxu0 0
        %758 = vmatprep.subr.bf16.mxu0 0
        %759 = vmatpush1.bf16.msra.mxu0 0
        %760 = vmatprep.subr.bf16.mxu0 0
        %761 = vmatpush1.bf16.msra.mxu0 0
        %762 = vmatprep.subr.bf16.mxu0 0
        %763 = vmatpush1.bf16.msra.mxu0 0
        %764 = vmatprep.subr.bf16.mxu0 0
        %765 = vmatpush1.bf16.msra.mxu0 0
        %766 = vmatprep.subr.bf16.mxu0 0
        %767 = vmatpush1.bf16.msra.mxu0 0
        %768 = vmatprep.subr.bf16.mxu0 0
        %769 = vmatpush1.bf16.msra.mxu0 0
        %770 = vmatprep.subr.bf16.mxu0 0
        %771 = vmatpush1.bf16.msra.mxu0 0
        %772 = vmatprep.subr.bf16.mxu0 0
        %773 = vmatpush1.bf16.msra.mxu0 0
        %774 = vmatprep.subr.bf16.mxu0 0
        %775 = vmatpush1.bf16.msra.mxu0 0
        %776 = vmatprep.mubr.bf16.mxu0 0
        %777 = vmatmul.mubr.bf16.gmra.mrb[0].mxu0 %v608
        %v778 = vpop.f32.mrb[0].mxu0
        %v779 = vadd.f32 %v570, %v778
        %v780 = vpop.f32.mrb[0].mxu0
        %v781 = vpop.f32.mrb[0].mxu0
        %v782 = vadd.f32 %v570, %v781
        %v783 = vpop.f32.mrb[0].mxu0
        %784 = vmatprep.mubr.bf16.mxu0 0
        %785 = vmatmul.mubr.bf16.gmra.mrb[0].mxu0 %v611
        %v786 = vpop.f32.mrb[0].mxu0
        %v787 = vadd.f32 %v570, %v786
        %v788 = vpop.f32.mrb[0].mxu0
        %v789 = vpop.f32.mrb[0].mxu0
        %v790 = vadd.f32 %v570, %v789
        %v791 = vpop.f32.mrb[0].mxu0
        %792 = vmatprep.mubr.bf16.mxu0 0
        %793 = vmatmul.mubr.bf16.gmra.mrb[0].mxu0 %v614
        %v794 = vpop.f32.mrb[0].mxu0
        %v795 = vadd.f32 %v570, %v794
        %v796 = vpop.f32.mrb[0].mxu0
        %v797 = vpop.f32.mrb[0].mxu0
        %v798 = vadd.f32 %v570, %v797
        %v799 = vpop.f32.mrb[0].mxu0
        %800 = vmatprep.mubr.bf16.mxu0 0
        %801 = vmatmul.mubr.bf16.gmra.mrb[0].mxu0 %v617
        %v802 = vpop.f32.mrb[0].mxu0
        %v803 = vadd.f32 %v570, %v802
        %v804 = vpop.f32.mrb[0].mxu0
        %v805 = vpop.f32.mrb[0].mxu0
        %v806 = vadd.f32 %v570, %v805
        %v807 = vpop.f32.mrb[0].mxu0
        %808 = vmatprep.mubr.bf16.mxu0 0
        %809 = vmatmul.mubr.bf16.gmra.mrb[0].mxu0 %v620
        %v810 = vpop.f32.mrb[0].mxu0
        %v811 = vadd.f32 %v570, %v810
        %v812 = vpop.f32.mrb[0].mxu0
        %v813 = vpop.f32.mrb[0].mxu0
        %v814 = vadd.f32 %v570, %v813
        %v815 = vpop.f32.mrb[0].mxu0
        %816 = vmatprep.mubr.bf16.mxu0 0
        %817 = vmatmul.mubr.bf16.gmra.mrb[0].mxu0 %v623
        %v818 = vpop.f32.mrb[0].mxu0
        %v819 = vadd.f32 %v570, %v818
        %v820 = vpop.f32.mrb[0].mxu0
        %v821 = vpop.f32.mrb[0].mxu0
        %v822 = vadd.f32 %v570, %v821
        %v823 = vpop.f32.mrb[0].mxu0
        %824 = vmatprep.mubr.bf16.mxu0 0
        %825 = vmatmul.mubr.bf16.gmra.mrb[0].mxu0 %v626
        %v826 = vpop.f32.mrb[0].mxu0
        %v827 = vadd.f32 %v570, %v826
        %v828 = vpop.f32.mrb[0].mxu0
        %v829 = vpop.f32.mrb[0].mxu0
        %v830 = vadd.f32 %v570, %v829
        %v831 = vpop.f32.mrb[0].mxu0
        %832 = vmatprep.mubr.bf16.mxu0 0
        %833 = vmatmul.mubr.bf16.gmra.mrb[0].mxu0 %v629
        %v834 = vpop.f32.mrb[0].mxu0
        %v835 = vadd.f32 %v570, %v834
        %v836 = vpop.f32.mrb[0].mxu0
        %v837 = vpop.f32.mrb[0].mxu0
        %v838 = vadd.f32 %v570, %v837
        %v839 = vpop.f32.mrb[0].mxu0
        %840 = vdwg.mxu0
        %v841 = vtanh.pop %v666
        %v842 = vtanh.pop %v670
        %v843 = vtanh.pop %v676
        %v844 = vtanh.pop %v680
        %v845 = vtanh.pop %v686
        %v846 = vtanh.pop %v690
        %v847 = vtanh.pop %v696
        %v848 = vtanh.pop %v700
        %v849 = vtanh.pop %v706
        %v850 = vtanh.pop %v710
        %v851 = vtanh.pop %v716
        %v852 = vtanh.pop %v720
        %v853 = vtanh.pop %v726
        %v854 = vtanh.pop %v730
        %v855 = vtanh.pop %v736
        %v856 = vtanh.pop %v740
        %v857 = vxor.u32 %v668, 2147483648
        %v858 = vxor.u32 %v672, 2147483648
        %v859 = vxor.u32 %v678, 2147483648
        %v860 = vxor.u32 %v682, 2147483648
        %v861 = vxor.u32 %v688, 2147483648
        %v862 = vxor.u32 %v692, 2147483648
        %v863 = vxor.u32 %v698, 2147483648
        %v864 = vxor.u32 %v702, 2147483648
        %v865 = vxor.u32 %v708, 2147483648
        %v866 = vxor.u32 %v712, 2147483648
        %v867 = vxor.u32 %v718, 2147483648
        %v868 = vxor.u32 %v722, 2147483648
        %v869 = vxor.u32 %v728, 2147483648
        %v870 = vxor.u32 %v732, 2147483648
        %v871 = vxor.u32 %v738, 2147483648
        %v872 = vxor.u32 %v742, 2147483648
        %v873 = vmul.f32 %v857, 1.442695
        %v874 = vpow.pop %v873
        %v875 = vmul.f32 %v858, 1.442695
        %v876 = vpow.pop %v875
        %v877 = vmul.f32 %v859, 1.442695
        %v878 = vpow.pop %v877
        %v879 = vmul.f32 %v860, 1.442695
        %v880 = vpow.pop %v879
        %v881 = vmul.f32 %v861, 1.442695
        %v882 = vpow.pop %v881
        %v883 = vmul.f32 %v862, 1.442695
        %v884 = vpow.pop %v883
        %v885 = vmul.f32 %v863, 1.442695
        %v886 = vpow.pop %v885
        %v887 = vmul.f32 %v864, 1.442695
        %v888 = vpow.pop %v887
        %v889 = vmul.f32 %v865, 1.442695
        %v890 = vpow.pop %v889
        %v891 = vmul.f32 %v866, 1.442695
        %v892 = vpow.pop %v891
        %v893 = vmul.f32 %v867, 1.442695
        %v894 = vpow.pop %v893
        %v895 = vmul.f32 %v868, 1.442695
        %v896 = vpow.pop %v895
        %v897 = vmul.f32 %v869, 1.442695
        %v898 = vpow.pop %v897
        %v899 = vmul.f32 %v870, 1.442695
        %v900 = vpow.pop %v899
        %v901 = vmul.f32 %v871, 1.442695
        %v902 = vpow.pop %v901
        %v903 = vmul.f32 %v872, 1.442695
        %v904 = vpow.pop %v903
        %v905 = vadd.f32 %v874, 1.0
        %v906 = vadd.f32 %v876, 1.0
        %v907 = vadd.f32 %v878, 1.0
        %v908 = vadd.f32 %v880, 1.0
        %v909 = vadd.f32 %v882, 1.0
        %v910 = vadd.f32 %v884, 1.0
        %v911 = vadd.f32 %v886, 1.0
        %v912 = vadd.f32 %v888, 1.0
        %v913 = vadd.f32 %v890, 1.0
        %v914 = vadd.f32 %v892, 1.0
        %v915 = vadd.f32 %v894, 1.0
        %v916 = vadd.f32 %v896, 1.0
        %v917 = vadd.f32 %v898, 1.0
        %v918 = vadd.f32 %v900, 1.0
        %v919 = vadd.f32 %v902, 1.0
        %v920 = vadd.f32 %v904, 1.0
        %v921 = vrcp.pop %v905
        %v922 = vmul.f32 1.0, %v921
        %v923 = vrcp.pop %v906
        %v924 = vmul.f32 1.0, %v923
        %v925 = vrcp.pop %v907
        %v926 = vmul.f32 1.0, %v925
        %v927 = vrcp.pop %v908
        %v928 = vmul.f32 1.0, %v927
        %v929 = vrcp.pop %v909
        %v930 = vmul.f32 1.0, %v929
        %v931 = vrcp.pop %v910
        %v932 = vmul.f32 1.0, %v931
        %v933 = vrcp.pop %v911
        %v934 = vmul.f32 1.0, %v933
        %v935 = vrcp.pop %v912
        %v936 = vmul.f32 1.0, %v935
        %v937 = vrcp.pop %v913
        %v938 = vmul.f32 1.0, %v937
        %v939 = vrcp.pop %v914
        %v940 = vmul.f32 1.0, %v939
        %v941 = vrcp.pop %v915
        %v942 = vmul.f32 1.0, %v941
        %v943 = vrcp.pop %v916
        %v944 = vmul.f32 1.0, %v943
        %v945 = vrcp.pop %v917
        %v946 = vmul.f32 1.0, %v945
        %v947 = vrcp.pop %v918
        %v948 = vmul.f32 1.0, %v947
        %v949 = vrcp.pop %v919
        %v950 = vmul.f32 1.0, %v949
        %v951 = vrcp.pop %v920
        %v952 = vmul.f32 1.0, %v951
        %v953 = vmul.f32 %v841, %v922
        %v954 = vmul.f32 %v842, %v924
        %v955 = vmul.f32 %v843, %v926
        %v956 = vmul.f32 %v844, %v928
        %v957 = vmul.f32 %v845, %v930
        %v958 = vmul.f32 %v846, %v932
        %v959 = vmul.f32 %v847, %v934
        %v960 = vmul.f32 %v848, %v936
        %v961 = vmul.f32 %v849, %v938
        %v962 = vmul.f32 %v850, %v940
        %v963 = vmul.f32 %v851, %v942
        %v964 = vmul.f32 %v852, %v944
        %v965 = vmul.f32 %v853, %v946
        %v966 = vmul.f32 %v854, %v948
        %v967 = vmul.f32 %v855, %v950
        %v968 = vmul.f32 %v856, %v952
        %v969 = vld [vmem:[%s5] sm:$0x1]
        %v971 = vlaneseq
        %v972 = vshrl.u32 %v971, 7
        %v973 = vsub.s32 0, %v972
        %v974 = vrot.slane %v969, %v973
        %v976 = vmul.f32 %v953, %v974
        %v977 = vmul.f32 %v954, %v974
        %v978 = vmul.f32 %v955, %v974
        %v979 = vmul.f32 %v956, %v974
        %v980 = vmul.f32 %v957, %v974
        %v981 = vmul.f32 %v958, %v974
        %v982 = vmul.f32 %v959, %v974
        %v983 = vmul.f32 %v960, %v974
        %v984 = vmul.f32 %v961, %v974
        %v985 = vmul.f32 %v962, %v974
        %v986 = vmul.f32 %v963, %v974
        %v987 = vmul.f32 %v964, %v974
        %v988 = vmul.f32 %v965, %v974
        %v989 = vmul.f32 %v966, %v974
        %v990 = vmul.f32 %v967, %v974
        %v991 = vmul.f32 %v968, %v974
        %vm992 = vcmask 130048
        %v993 = vsel %vm992, %v976, 0.0
        %994 = vadd.xlane.f32.xlu0 %v993
        %v995 = vpop.xlane.xlu0 %994
        %v996 = vsel %vm992, %v977, 0.0
        %997 = vadd.xlane.f32.xlu0 %v996
        %v998 = vpop.xlane.xlu0 %997
        %v999 = vsel %vm992, %v978, 0.0
        %1000 = vadd.xlane.f32.xlu0 %v999
        %v1001 = vpop.xlane.xlu0 %1000
        %v1002 = vsel %vm992, %v979, 0.0
        %1003 = vadd.xlane.f32.xlu0 %v1002
        %v1004 = vpop.xlane.xlu0 %1003
        %v1005 = vsel %vm992, %v980, 0.0
        %1006 = vadd.xlane.f32.xlu0 %v1005
        %v1007 = vpop.xlane.xlu0 %1006
        %v1008 = vsel %vm992, %v981, 0.0
        %1009 = vadd.xlane.f32.xlu0 %v1008
        %v1010 = vpop.xlane.xlu0 %1009
        %v1011 = vsel %vm992, %v982, 0.0
        %1012 = vadd.xlane.f32.xlu0 %v1011
        %v1013 = vpop.xlane.xlu0 %1012
        %v1014 = vsel %vm992, %v983, 0.0
        %1015 = vadd.xlane.f32.xlu0 %v1014
        %v1016 = vpop.xlane.xlu0 %1015
        %v1017 = vsel %vm992, %v984, 0.0
        %1018 = vadd.xlane.f32.xlu0 %v1017
        %v1019 = vpop.xlane.xlu0 %1018
        %v1020 = vsel %vm992, %v985, 0.0
        %1021 = vadd.xlane.f32.xlu0 %v1020
        %v1022 = vpop.xlane.xlu0 %1021
        %v1023 = vsel %vm992, %v986, 0.0
        %1024 = vadd.xlane.f32.xlu0 %v1023
        %v1025 = vpop.xlane.xlu0 %1024
        %v1026 = vsel %vm992, %v987, 0.0
        %1027 = vadd.xlane.f32.xlu0 %v1026
        %v1028 = vpop.xlane.xlu0 %1027
        %v1029 = vsel %vm992, %v988, 0.0
        %1030 = vadd.xlane.f32.xlu0 %v1029
        %v1031 = vpop.xlane.xlu0 %1030
        %v1032 = vsel %vm992, %v989, 0.0
        %1033 = vadd.xlane.f32.xlu0 %v1032
        %v1034 = vpop.xlane.xlu0 %1033
        %v1035 = vsel %vm992, %v990, 0.0
        %1036 = vadd.xlane.f32.xlu0 %v1035
        %v1037 = vpop.xlane.xlu0 %1036
        %v1038 = vsel %vm992, %v991, 0.0
        %1039 = vadd.xlane.f32.xlu0 %v1038
        %v1040 = vpop.xlane.xlu0 %1039
        %v1041 = vld [vmem:[#allocation2] sm:$0x1]
        %v1043 = vlaneseq
        %v1044 = vshrl.u32 %v1043, 7
        %v1045 = vsub.s32 0, %v1044
        %v1046 = vrot.slane %v1041, %v1045
        %v1048 = vadd.f32 %v995, %v1046
        %v1049 = vadd.f32 %v998, %v1046
        %v1050 = vadd.f32 %v1001, %v1046
        %v1051 = vadd.f32 %v1004, %v1046
        %v1052 = vadd.f32 %v1007, %v1046
        %v1053 = vadd.f32 %v1010, %v1046
        %v1054 = vadd.f32 %v1013, %v1046
        %v1055 = vadd.f32 %v1016, %v1046
        %v1056 = vadd.f32 %v1019, %v1046
        %v1057 = vadd.f32 %v1022, %v1046
        %v1058 = vadd.f32 %v1025, %v1046
        %v1059 = vadd.f32 %v1028, %v1046
        %v1060 = vadd.f32 %v1031, %v1046
        %v1061 = vadd.f32 %v1034, %v1046
        %v1062 = vadd.f32 %v1037, %v1046
        %v1063 = vadd.f32 %v1040, %v1046
        %v1064 = vxor.u32 %v1048, 2147483648
        %v1065 = vxor.u32 %v1049, 2147483648
        %v1066 = vxor.u32 %v1050, 2147483648
        %v1067 = vxor.u32 %v1051, 2147483648
        %v1068 = vxor.u32 %v1052, 2147483648
        %v1069 = vxor.u32 %v1053, 2147483648
        %v1070 = vxor.u32 %v1054, 2147483648
        %v1071 = vxor.u32 %v1055, 2147483648
        %v1072 = vxor.u32 %v1056, 2147483648
        %v1073 = vxor.u32 %v1057, 2147483648
        %v1074 = vxor.u32 %v1058, 2147483648
        %v1075 = vxor.u32 %v1059, 2147483648
        %v1076 = vxor.u32 %v1060, 2147483648
        %v1077 = vxor.u32 %v1061, 2147483648
        %v1078 = vxor.u32 %v1062, 2147483648
        %v1079 = vxor.u32 %v1063, 2147483648
        %v1080 = vmul.f32 %v1064, 1.442695
        %v1081 = vpow.pop %v1080
        %v1082 = vmul.f32 %v1065, 1.442695
        %v1083 = vpow.pop %v1082
        %v1084 = vmul.f32 %v1066, 1.442695
        %v1085 = vpow.pop %v1084
        %v1086 = vmul.f32 %v1067, 1.442695
        %v1087 = vpow.pop %v1086
        %v1088 = vmul.f32 %v1068, 1.442695
        %v1089 = vpow.pop %v1088
        %v1090 = vmul.f32 %v1069, 1.442695
        %v1091 = vpow.pop %v1090
        %v1092 = vmul.f32 %v1070, 1.442695
        %v1093 = vpow.pop %v1092
        %v1094 = vmul.f32 %v1071, 1.442695
        %v1095 = vpow.pop %v1094
        %v1096 = vmul.f32 %v1072, 1.442695
        %v1097 = vpow.pop %v1096
        %v1098 = vmul.f32 %v1073, 1.442695
        %v1099 = vpow.pop %v1098
        %v1100 = vmul.f32 %v1074, 1.442695
        %v1101 = vpow.pop %v1100
        %v1102 = vmul.f32 %v1075, 1.442695
        %v1103 = vpow.pop %v1102
        %v1104 = vmul.f32 %v1076, 1.442695
        %v1105 = vpow.pop %v1104
        %v1106 = vmul.f32 %v1077, 1.442695
        %v1107 = vpow.pop %v1106
        %v1108 = vmul.f32 %v1078, 1.442695
        %v1109 = vpow.pop %v1108
        %v1110 = vmul.f32 %v1079, 1.442695
        %v1111 = vpow.pop %v1110
        %v1112 = vadd.f32 %v1081, 1.0
        %v1113 = vadd.f32 %v1083, 1.0
        %v1114 = vadd.f32 %v1085, 1.0
        %v1115 = vadd.f32 %v1087, 1.0
        %v1116 = vadd.f32 %v1089, 1.0
        %v1117 = vadd.f32 %v1091, 1.0
        %v1118 = vadd.f32 %v1093, 1.0
        %v1119 = vadd.f32 %v1095, 1.0
        %v1120 = vadd.f32 %v1097, 1.0
        %v1121 = vadd.f32 %v1099, 1.0
        %v1122 = vadd.f32 %v1101, 1.0
        %v1123 = vadd.f32 %v1103, 1.0
        %v1124 = vadd.f32 %v1105, 1.0
        %v1125 = vadd.f32 %v1107, 1.0
        %v1126 = vadd.f32 %v1109, 1.0
        %v1127 = vadd.f32 %v1111, 1.0
        %v1128 = vrcp.pop %v1112
        %v1129 = vmul.f32 1.0, %v1128
        %v1130 = vrcp.pop %v1113
        %v1131 = vmul.f32 1.0, %v1130
        %v1132 = vrcp.pop %v1114
        %v1133 = vmul.f32 1.0, %v1132
        %v1134 = vrcp.pop %v1115
        %v1135 = vmul.f32 1.0, %v1134
        %v1136 = vrcp.pop %v1116
        %v1137 = vmul.f32 1.0, %v1136
        %v1138 = vrcp.pop %v1117
        %v1139 = vmul.f32 1.0, %v1138
        %v1140 = vrcp.pop %v1118
        %v1141 = vmul.f32 1.0, %v1140
        %v1142 = vrcp.pop %v1119
        %v1143 = vmul.f32 1.0, %v1142
        %v1144 = vrcp.pop %v1120
        %v1145 = vmul.f32 1.0, %v1144
        %v1146 = vrcp.pop %v1121
        %v1147 = vmul.f32 1.0, %v1146
        %v1148 = vrcp.pop %v1122
        %v1149 = vmul.f32 1.0, %v1148
        %v1150 = vrcp.pop %v1123
        %v1151 = vmul.f32 1.0, %v1150
        %v1152 = vrcp.pop %v1124
        %v1153 = vmul.f32 1.0, %v1152
        %v1154 = vrcp.pop %v1125
        %v1155 = vmul.f32 1.0, %v1154
        %v1156 = vrcp.pop %v1126
        %v1157 = vmul.f32 1.0, %v1156
        %v1158 = vrcp.pop %v1127
        %v1159 = vmul.f32 1.0, %v1158
        %1160 = vxpose.xlu0.b32.start [1/16] %v1048, 128
        %1161 = vxpose.xlu0.b32.cont [2/16] %v1049, 128
        %1162 = vxpose.xlu0.b32.cont [3/16] %v1050, 128
        %1163 = vxpose.xlu0.b32.cont [4/16] %v1051, 128
        %1164 = vxpose.xlu0.b32.cont [5/16] %v1052, 128
        %1165 = vxpose.xlu0.b32.cont [6/16] %v1053, 128
        %1166 = vxpose.xlu0.b32.cont [7/16] %v1054, 128
        %1167 = vxpose.xlu0.b32.cont [8/16] %v1055, 128
        %1168 = vxpose.xlu0.b32.cont [9/16] %v1056, 128
        %1169 = vxpose.xlu0.b32.cont [10/16] %v1057, 128
        %1170 = vxpose.xlu0.b32.cont [11/16] %v1058, 128
        %1171 = vxpose.xlu0.b32.cont [12/16] %v1059, 128
        %1172 = vxpose.xlu0.b32.cont [13/16] %v1060, 128
        %1173 = vxpose.xlu0.b32.cont [14/16] %v1061, 128
        %1174 = vxpose.xlu0.b32.cont [15/16] %v1062, 128
        %1175 = vxpose.xlu0.b32.end [16/16] %v1063, 128
        %v1176 = vpop.trf.xlu0
        %v1177 = vpop.trf.xlu0
        %v1178 = vpop.trf.xlu0
        %v1179 = vpop.trf.xlu0
        %v1180 = vpop.trf.xlu0
        %v1181 = vpop.trf.xlu0
        %v1182 = vpop.trf.xlu0
        %v1183 = vpop.trf.xlu0
        %v1184 = vpop.trf.xlu0
        %v1185 = vpop.trf.xlu0
        %v1186 = vpop.trf.xlu0
        %v1187 = vpop.trf.xlu0
        %v1188 = vpop.trf.xlu0
        %v1189 = vpop.trf.xlu0
        %v1190 = vpop.trf.xlu0
        %v1191 = vpop.trf.xlu0
        %1192 = vxpose.xlu0.b32.start [1/16] %v1129, 128
        %1193 = vxpose.xlu0.b32.cont [2/16] %v1131, 128
        %1194 = vxpose.xlu0.b32.cont [3/16] %v1133, 128
        %1195 = vxpose.xlu0.b32.cont [4/16] %v1135, 128
        %1196 = vxpose.xlu0.b32.cont [5/16] %v1137, 128
        %1197 = vxpose.xlu0.b32.cont [6/16] %v1139, 128
        %1198 = vxpose.xlu0.b32.cont [7/16] %v1141, 128
        %1199 = vxpose.xlu0.b32.cont [8/16] %v1143, 128
        %1200 = vxpose.xlu0.b32.cont [9/16] %v1145, 128
        %1201 = vxpose.xlu0.b32.cont [10/16] %v1147, 128
        %1202 = vxpose.xlu0.b32.cont [11/16] %v1149, 128
        %1203 = vxpose.xlu0.b32.cont [12/16] %v1151, 128
        %1204 = vxpose.xlu0.b32.cont [13/16] %v1153, 128
        %1205 = vxpose.xlu0.b32.cont [14/16] %v1155, 128
        %1206 = vxpose.xlu0.b32.cont [15/16] %v1157, 128
        %1207 = vxpose.xlu0.b32.end [16/16] %v1159, 128
        %v1208 = vpop.trf.xlu0
        %v1209 = vpop.trf.xlu0
        %v1210 = vpop.trf.xlu0
        %v1211 = vpop.trf.xlu0
        %v1212 = vpop.trf.xlu0
        %v1213 = vpop.trf.xlu0
        %v1214 = vpop.trf.xlu0
        %v1215 = vpop.trf.xlu0
        %v1216 = vpop.trf.xlu0
        %v1217 = vpop.trf.xlu0
        %v1218 = vpop.trf.xlu0
        %v1219 = vpop.trf.xlu0
        %v1220 = vpop.trf.xlu0
        %v1221 = vpop.trf.xlu0
        %v1222 = vpop.trf.xlu0
        %v1223 = vpop.trf.xlu0
        %v1225 = vrot.slane %v1208, 7
        %vm1227 = vcmask 1040384
        %v1228 = vsel %vm1227, %v1176, %v1225
        %1229 = vst [vmem:[%s317] sm:$0x3] %v1228
        %1230 = vxpose.xlu0.b32.start [1/16] %v779, 128
        %1231 = vxpose.xlu0.b32.cont [2/16] %v782, 128
        %1232 = vxpose.xlu0.b32.cont [3/16] %v787, 128
        %1233 = vxpose.xlu0.b32.cont [4/16] %v790, 128
        %1234 = vxpose.xlu0.b32.cont [5/16] %v795, 128
        %1235 = vxpose.xlu0.b32.cont [6/16] %v798, 128
        %1236 = vxpose.xlu0.b32.cont [7/16] %v803, 128
        %1237 = vxpose.xlu0.b32.cont [8/16] %v806, 128
        %1238 = vxpose.xlu0.b32.cont [9/16] %v811, 128
        %1239 = vxpose.xlu0.b32.cont [10/16] %v814, 128
        %1240 = vxpose.xlu0.b32.cont [11/16] %v819, 128
        %1241 = vxpose.xlu0.b32.cont [12/16] %v822, 128
        %1242 = vxpose.xlu0.b32.cont [13/16] %v827, 128
        %1243 = vxpose.xlu0.b32.cont [14/16] %v830, 128
        %1244 = vxpose.xlu0.b32.cont [15/16] %v835, 128
        %1245 = vxpose.xlu0.b32.end [16/16] %v838, 128
        %v1246 = vpop.trf.xlu0
        %v1247 = vpop.trf.xlu0
        %v1248 = vpop.trf.xlu0
        %v1249 = vpop.trf.xlu0
        %v1250 = vpop.trf.xlu0
        %v1251 = vpop.trf.xlu0
        %v1252 = vpop.trf.xlu0
        %v1253 = vpop.trf.xlu0
        %v1254 = vpop.trf.xlu0
        %v1255 = vpop.trf.xlu0
        %v1256 = vpop.trf.xlu0
        %v1257 = vpop.trf.xlu0
        %v1258 = vpop.trf.xlu0
        %v1259 = vpop.trf.xlu0
        %v1260 = vpop.trf.xlu0
        %v1261 = vpop.trf.xlu0
        %1262 = vst [vmem:[%s324] sm:$0x3] %v1246
        %s1263 = sand.u32 %s188, 1
        %s1264 = scalar_lea.sflag [#allocation4], %s1263
        %s1265 = sand.u32 %s188, 1
        %s1266 = smul.addr %s1265, 2
        %s1267 = scalar_lea.vmem [#allocation3], %s1266
        %s1268 = sand.u32 %s214, 1
        %s1269 = scalar_lea.sflag [#allocation6], %s1268
        %s1270 = sand.u32 %s214, 1
        %s1271 = smul.addr %s1270, 2
        %s1272 = scalar_lea.vmem [#allocation5], %s1271
        // Predicated region
        $region49: #{tpu_custom_call.1} parent=47 // pred_check
          %p1273 = pneg %p198
        $region50: #{tpu_custom_call.1} parent=47 // pred_check_branch
          %1275 = sbr.rel (%p1273) target = $region52
        $region51: #{tpu_custom_call.1} parent=47 // pred_region
          %s1277 = ssub.s32 32, 32
          %1278 = vsyncadd %s1264, %s1277
          %s1279 = smul.addr %s28, 32
          %s1280 = scalar_lea.hbm %s7, %s1279
          %s1282 = sshll.u32 %s1267, 4
          %s1283 = int_to_ptr.vmem [resolvable:$true] %s1282
          %1285 = dma.vmem_to_hbm [thread:$0]  %s1283, 32, %s1280, %s1264
        $region52: #{tpu_custom_call.1} parent=47 // pred_fallthru
          _
        // Predicated region
        $region53: #{tpu_custom_call.1} parent=47 // pred_check
          %p1286 = pneg %p224
        $region54: #{tpu_custom_call.1} parent=47 // pred_check_branch
          %1288 = sbr.rel (%p1286) target = $region56
        $region55: #{tpu_custom_call.1} parent=47 // pred_region
          %s1290 = ssub.s32 32, 32
          %1291 = vsyncadd %s1269, %s1290
          %s1292 = smul.addr %s28, 32
          %s1293 = scalar_lea.hbm %s8, %s1292
          %s1295 = sshll.u32 %s1272, 4
          %s1296 = int_to_ptr.vmem [resolvable:$true] %s1295
          %1298 = dma.vmem_to_hbm [thread:$0]  %s1296, 32, %s1293, %s1269
        $region56: #{tpu_custom_call.1} parent=47 // pred_fallthru
          _
      $region48: #{tpu_custom_call.1} parent=5 // pred_fallthru
        _
      %p1299 = scmp.le.s32.totalorder 2, %s23
      // Predicated region
      $region57: #{tpu_custom_call.1} parent=5 // pred_check
        %p1300 = pneg %p1299
      $region58: #{tpu_custom_call.1} parent=5 // pred_check_branch
        %1302 = sbr.rel (%p1300) target = $region60
      $region59: #{tpu_custom_call.1} parent=5 // pred_region
        %s1303 = ssub.s32 %s23, 2
        // Predicated region
        $region61: #{tpu_custom_call.1} parent=59 // pred_check
          %p1304 = pneg %p204
        $region62: #{tpu_custom_call.1} parent=59 // pred_check_branch
          %1306 = sbr.rel (%p1304) target = $region64
        $region63: #{tpu_custom_call.1} parent=59 // pred_region
          %s1307 = sand.u32 %s189, 1
          %s1308 = scalar_lea.sflag [#allocation4], %s1307
          %s1309 = sand.u32 %s189, 1
          %s1310 = smul.addr %s1309, 2
          %s1311 = scalar_lea.vmem [#allocation3], %s1310
          %1312 = dma.done %s1308, 32
        $region64: #{tpu_custom_call.1} parent=59 // pred_fallthru
          _
        // Predicated region
        $region65: #{tpu_custom_call.1} parent=59 // pred_check
          %p1313 = pneg %p230
        $region66: #{tpu_custom_call.1} parent=59 // pred_check_branch
          %1315 = sbr.rel (%p1313) target = $region68
        $region67: #{tpu_custom_call.1} parent=59 // pred_region
          %s1316 = sand.u32 %s215, 1
          %s1317 = scalar_lea.sflag [#allocation6], %s1316
          %s1318 = sand.u32 %s215, 1
          %s1319 = smul.addr %s1318, 2
          %s1320 = scalar_lea.vmem [#allocation5], %s1319
          %1321 = dma.done %s1317, 32
        $region68: #{tpu_custom_call.1} parent=59 // pred_fallthru
          _
      $region60: #{tpu_custom_call.1} parent=5 // pred_fallthru
        _
    $region6: #{tpu_custom_call.1} parent=1 // loop_footer
      %s27 = sadd.s32 1, %s23
    $region7: #{tpu_custom_call.1} parent=1 // loop_footer_branch
      %22 = sbr.rel target = $region3
    $region8: #{tpu_custom_call.1} parent=1 // loop_exit
      _
    %1322 = vsyncpa [#allocation4], 1
    %s1323 = scalar_lea.sflag [#allocation4], 1
    %1324 = vsyncpa %s1323, 1
    %1325 = vsyncpa [#allocation6], 1
    %s1326 = scalar_lea.sflag [#allocation6], 1
    %1327 = vsyncpa %s1326, 1

</llo_original>
